<compile_context>
chip_gen: v7x
topology: tpu7x:2x2x1
jax: 0.10.0
libtpu: 0.0.40
codegen_flags: <defaults>
</compile_context>

<pallas_src>
import functools

import jax
import jax.numpy as jnp
from jax import lax
from jax.experimental import pallas as pl
from jax.experimental.pallas import tpu as pltpu


def _dropblock_tile_kernel(seed_ref, a_ref, y_ref, cnt_ref, pad_ref, *,
                           thr31, block_size, c_total):
    """Phase-1 DropBlock kernel for one (1, H, W, C_TILE) block.

    seed_ref : SMEM (1,) int32           -- scalar-prefetched PRNG seed
    a_ref    : VMEM (1, H, W, Ct)        -- input activations (NHWC block)
    y_ref    : VMEM (1, H, W, Ct)        -- A * mask (unscaled)
    cnt_ref  : VMEM (1, 1, 1, 1) float32 -- number of *kept* elements in this tile
    pad_ref  : VMEM scratch (H+2p, W+2p, Ct) int32 -- zero-halo padded seed mask
    """
    _, h, w, ct = a_ref.shape
    p = block_size // 2
    ni = pl.program_id(0)   # batch index
    ci = pl.program_id(1)   # channel-tile index

    # ---- Bernoulli(gamma) via a stateless counter-based hash PRNG --------------
    # Global element id (unique over the whole (N, H, W, C) tensor, so the random
    # field does not depend on how we tile it, and every tile gets its own stream).
    hi = lax.broadcasted_iota(jnp.int32, (h, w, ct), 0)
    wi = lax.broadcasted_iota(jnp.int32, (h, w, ct), 1)
    ki = lax.broadcasted_iota(jnp.int32, (h, w, ct), 2)
    gidx = ((ni * h + hi) * w + wi) * c_total + (ci * ct + ki)

    seed = seed_ref[0]
    mix = seed * jnp.int32(0x19660D) + jnp.int32(0x3C6EF35F)      # scalar LCG step
    u = (gidx ^ mix).astype(jnp.uint32)
    # murmur3 finalizer (good avalanche; uses only u32 mul/xor/shift).
    u = u ^ (u >> 16)
    u = u * jnp.uint32(0x7FEB352D)
    u = u ^ (u >> 15)
    u = u * jnp.uint32(0x846CA68B)
    u = u ^ (u >> 16)
    r31 = (u >> 1).astype(jnp.int32)                 # uniform in [0, 2**31)
    seed_mask = (r31 < jnp.int32(thr31)).astype(jnp.int32)   # 1 where a block seed drops

    # ---- separable max_pool2d(kernel=b, stride=1, padding=b//2) -----------------
    # Zero only the halo of the padded scratch (not the whole buffer), then write
    # the sampled seed mask into the center.
    if p > 0:
        zrow = jnp.zeros((p, w + 2 * p, ct), jnp.int32)
        pad_ref[0:p, :, :] = zrow
        pad_ref[p + h:p + h + p, :, :] = zrow
        zcol = jnp.zeros((h + 2 * p, p, ct), jnp.int32)
        pad_ref[:, 0:p, :] = zcol
        pad_ref[:, p + w:p + w + p, :] = zcol
    pad_ref[p:p + h, p:p + w, :] = seed_mask

    # Pass 1: pool along H -- leading-axis ref slices, no lane/sublane relayout.
    ph = pad_ref[0:h, :, :]
    for di in range(1, block_size):
        ph = jnp.maximum(ph, pad_ref[di:di + h, :, :])
    # Pass 2: pool along W -- b sublane value slices (XLU work only).
    pooled = ph[:, 0:w, :]
    for dj in range(1, block_size):
        pooled = jnp.maximum(pooled, ph[:, dj:dj + w, :])

    keep = pooled == 0                               # mask == 1 in torch terms
    a = a_ref[0]
    y_ref[0] = jnp.where(keep, a, jnp.zeros_like(a))  # A * mask (unscaled)

    # Per-tile count of kept elements; the global sum / rescale happens outside.
    kept = jnp.sum(jnp.where(keep, 1.0, 0.0))
    cnt_ref[...] = jnp.full((1, 1, 1, 1), kept, dtype=jnp.float32)


def _vmem_limit_bytes():
    """Scoped-VMEM limit: half the physical capacity, clamped to a safe range."""
    try:
        cap = int(pltpu.get_tpu_info().vmem_capacity_bytes)
    except Exception:
        cap = 64 * 1024 * 1024          # conservative (v7x-sized) fallback
    return int(min(max(cap // 2, 32 * 1024 * 1024), 96 * 1024 * 1024))


def _pick_c_tile(c, h, w, itemsize, target_bytes):
    """Channel tile: a multiple of 128 (lane width) dividing C, or all of C."""
    if c % 128 != 0:
        return c                        # cannot split the lane dim off-multiple
    best = 128
    for t in range(128, c + 1, 128):
        if c % t == 0 and h * w * t * itemsize <= target_bytes:
            best = t
    return best


def dropblock(x, seed, *, block_size, keep_prob, training=True):
    """DropBlock forward. x: (N, C, H, W)."""
    assert x.ndim == 4, "Expecting input tensor of shape (N, C, H, W)"
    if (not training) or keep_prob == 1.0:
        return x

    n, c, h, w = x.shape
    # Odd block_size is required for the shape-preserving pooling (same implicit
    # assumption as the torch module) and the spatial dims must cover one block.
    assert block_size % 2 == 1, "block_size must be odd for shape-preserving pooling"
    assert h >= block_size and w >= block_size

    gamma = ((1.0 - keep_prob) / (block_size ** 2)
             * (h / (h - block_size + 1))
             * (w / (w - block_size + 1)))
    # Integer Bernoulli threshold: P(drop seed) = thr31 / 2**31 == gamma.
    thr31 = min(int(min(max(gamma, 0.0), 1.0) * float(2 ** 31)), 2 ** 31 - 1)

    p = block_size // 2
    vmem_limit = _vmem_limit_bytes()
    # Per-step working set ~= 2x in-block + 2x out-block (double buffering) +
    # int32 scratch + temporaries ~= 8-10x the block bytes -> target ~ limit/12.
    target_block_bytes = min(max(vmem_limit // 12, 512 * 1024), 8 * 1024 * 1024)
    c_t = _pick_c_tile(c, h, w, jnp.dtype(x.dtype).itemsize, target_block_bytes)
    num_c_tiles = c // c_t

    # Channels-last so C sits on the lane axis.
    x_nhwc = jnp.transpose(x, (0, 2, 3, 1))
    seed_arr = jnp.asarray([seed], dtype=jnp.int32)

    kernel = functools.partial(_dropblock_tile_kernel,
                               thr31=thr31, block_size=block_size, c_total=c)

    y_nhwc, cnt = pl.pallas_call(
        kernel,
        out_shape=(
            jax.ShapeDtypeStruct((n, h, w, c), x.dtype),
            jax.ShapeDtypeStruct((n, num_c_tiles, 1, 1), jnp.float32),
        ),
        grid_spec=pltpu.PrefetchScalarGridSpec(
            num_scalar_prefetch=1,
            grid=(n, num_c_tiles),
            in_specs=[
                pl.BlockSpec((1, h, w, c_t), lambda ni, ci, seed_ref: (ni, 0, 0, ci)),
            ],
            out_specs=(
                pl.BlockSpec((1, h, w, c_t), lambda ni, ci, seed_ref: (ni, 0, 0, ci)),
                pl.BlockSpec((1, 1, 1, 1), lambda ni, ci, seed_ref: (ni, ci, 0, 0)),
            ),
            scratch_shapes=[pltpu.VMEM((h + 2 * p, w + 2 * p, c_t), jnp.int32)],
        ),
        compiler_params=pltpu.CompilerParams(
            dimension_semantics=("parallel", "parallel"),
            vmem_limit_bytes=vmem_limit,
        ),
    )(seed_arr, x_nhwc)

    # Phase 2: global rescale A*mask * numel / mask.sum()  (plain XLA, one scalar).
    total_kept = jnp.sum(cnt)
    # Guard against the (pathological) all-dropped case that would give inf/NaN.
    total_kept = jnp.maximum(total_kept, 1.0)
    scale = (jnp.float32(n * c * h * w) / total_kept).astype(x.dtype)
    z_nhwc = y_nhwc * scale
    return jnp.transpose(z_nhwc, (0, 3, 1, 2))


if __name__ == "__main__":
    key = jax.random.PRNGKey(0)
    # Strictly positive inputs so "dropped" positions are exactly the zeros of z.
    x = jax.random.uniform(key, (2, 4, 16, 16), dtype=jnp.float32,
                           minval=0.5, maxval=1.5)

    block_size = 3
    keep_prob = 0.9

    z = dropblock(x, seed=1234, block_size=block_size, keep_prob=keep_prob,
                  training=True)
    z = jax.block_until_ready(z)

    assert z.shape == x.shape
    assert bool(jnp.all(jnp.isfinite(z)))

    # Structural check mirroring the torch semantics: kept elements are the input
    # scaled by one *global* factor equal to numel / kept_count, dropped ones are 0.
    kept = z != 0.0
    n_kept = jnp.sum(kept)
    assert int(n_kept) > 0 and int(n_kept) < x.size
    expected_scale = jnp.float32(x.size) / jnp.maximum(n_kept, 1).astype(jnp.float32)
    ratio = jnp.where(kept, z / x, expected_scale)
    assert bool(jnp.allclose(ratio, expected_scale, rtol=1e-4, atol=1e-4))

    # Eval / keep_prob == 1.0 path is identity, as in the torch module.
    z_eval = dropblock(x, seed=1234, block_size=block_size, keep_prob=keep_prob,
                       training=False)
    assert bool(jnp.array_equal(z_eval, x))

    print("KERNEL_OK")
</pallas_src>

<mosaic_0001>
module attributes {stable_mosaic.version = 11 : i64} {
  func.func @_dropblock_tile_kernel(%arg0: i32, %arg1: i32, %arg2: memref<1xi32, #tpu.memory_space<smem>>, %arg3: memref<1x16x16x4xf32, #tpu.memory_space<vmem>>, %arg4: memref<1x16x16x4xf32, #tpu.memory_space<vmem>>, %arg5: memref<1x1x1x1xf32, #tpu.memory_space<vmem>>, %arg6: memref<18x18x4xi32, #tpu.memory_space<vmem>>) attributes {dimension_semantics = [#tpu.dimension_semantics<parallel>, #tpu.dimension_semantics<parallel>], iteration_bounds = array<i64: 2, 1>, scalar_prefetch = 1 : i64, scratch_operands = 1 : i64, tpu.core_type = #tpu.core_type<tc>, window_params = [{transform_indices = @transform_0, window_bounds = array<i64: 1, 16, 16, 4>}, {transform_indices = @transform_1, window_bounds = array<i64: 1, 16, 16, 4>}, {transform_indices = @transform_2, window_bounds = array<i64: 1, 1, 1, 1>}]} {
    %0 = tpu.iota {dimensions = array<i32: 0>} : vector<16x16x4xi32>
    %1 = tpu.iota {dimensions = array<i32: 1>} : vector<16x16x4xi32>
    %2 = tpu.iota {dimensions = array<i32: 2>} : vector<16x16x4xi32>
    %c16_i32 = arith.constant 16 : i32
    %3 = arith.muli %arg0, %c16_i32 : i32
    %4 = vector.broadcast %3 : i32 to vector<16x16x4xi32>
    %5 = arith.addi %4, %0 : vector<16x16x4xi32>
    %c16_i32_0 = arith.constant 16 : i32
    %6 = vector.broadcast %c16_i32_0 : i32 to vector<16x16x4xi32>
    %7 = arith.muli %5, %6 : vector<16x16x4xi32>
    %8 = arith.addi %7, %1 : vector<16x16x4xi32>
    %c4_i32 = arith.constant 4 : i32
    %9 = vector.broadcast %c4_i32 : i32 to vector<16x16x4xi32>
    %10 = arith.muli %8, %9 : vector<16x16x4xi32>
    %c4_i32_1 = arith.constant 4 : i32
    %11 = arith.muli %arg1, %c4_i32_1 : i32
    %12 = vector.broadcast %11 : i32 to vector<16x16x4xi32>
    %13 = arith.addi %12, %2 : vector<16x16x4xi32>
    %14 = arith.addi %10, %13 : vector<16x16x4xi32>
    %c0 = arith.constant 0 : index
    %15 = memref.load %arg2[%c0] : memref<1xi32, #tpu.memory_space<smem>>
    %c1664525_i32 = arith.constant 1664525 : i32
    %16 = arith.muli %15, %c1664525_i32 : i32
    %c1013904223_i32 = arith.constant 1013904223 : i32
    %17 = arith.addi %16, %c1013904223_i32 : i32
    %18 = vector.broadcast %17 : i32 to vector<16x16x4xi32>
    %19 = arith.xori %14, %18 : vector<16x16x4xi32>
    %c16_i32_2 = arith.constant 16 : i32
    %20 = vector.broadcast %c16_i32_2 : i32 to vector<16x16x4xi32>
    %21 = arith.shrui %19, %20 : vector<16x16x4xi32>
    %22 = arith.xori %19, %21 : vector<16x16x4xi32>
    %c2146121005_i32 = arith.constant 2146121005 : i32
    %23 = vector.broadcast %c2146121005_i32 : i32 to vector<16x16x4xi32>
    %24 = arith.muli %22, %23 : vector<16x16x4xi32>
    %c15_i32 = arith.constant 15 : i32
    %25 = vector.broadcast %c15_i32 : i32 to vector<16x16x4xi32>
    %26 = arith.shrui %24, %25 : vector<16x16x4xi32>
    %27 = arith.xori %24, %26 : vector<16x16x4xi32>
    %c-2073254261_i32 = arith.constant -2073254261 : i32
    %28 = vector.broadcast %c-2073254261_i32 : i32 to vector<16x16x4xi32>
    %29 = arith.muli %27, %28 : vector<16x16x4xi32>
    %c16_i32_3 = arith.constant 16 : i32
    %30 = vector.broadcast %c16_i32_3 : i32 to vector<16x16x4xi32>
    %31 = arith.shrui %29, %30 : vector<16x16x4xi32>
    %32 = arith.xori %29, %31 : vector<16x16x4xi32>
    %c1_i32 = arith.constant 1 : i32
    %33 = vector.broadcast %c1_i32 : i32 to vector<16x16x4xi32>
    %34 = arith.shrui %32, %33 : vector<16x16x4xi32>
    %c31165295_i32 = arith.constant 31165295 : i32
    %35 = vector.broadcast %c31165295_i32 : i32 to vector<16x16x4xi32>
    %36 = arith.cmpi slt, %34, %35 : vector<16x16x4xi32>
    %37 = arith.extui %36 : vector<16x16x4xi1> to vector<16x16x4xi32>
    %c0_i32 = arith.constant 0 : i32
    %38 = vector.broadcast %c0_i32 : i32 to vector<1x18x4xi32>
    %c0_4 = arith.constant 0 : index
    %c0_5 = arith.constant 0 : index
    %c0_6 = arith.constant 0 : index
    %39 = vector.load %arg6[%c0_4, %c0_5, %c0_6] : memref<18x18x4xi32, #tpu.memory_space<vmem>>, vector<1x18x4xi32>
    tpu.vector_store %arg6[%c0_4, %c0_5, %c0_6], %38 {strides = array<i32>} : memref<18x18x4xi32, #tpu.memory_space<vmem>>, vector<1x18x4xi32>,
    %c17 = arith.constant 17 : index
    %c0_7 = arith.constant 0 : index
    %c0_8 = arith.constant 0 : index
    %40 = vector.load %arg6[%c17, %c0_7, %c0_8] : memref<18x18x4xi32, #tpu.memory_space<vmem>>, vector<1x18x4xi32>
    tpu.vector_store %arg6[%c17, %c0_7, %c0_8], %38 {strides = array<i32>} : memref<18x18x4xi32, #tpu.memory_space<vmem>>, vector<1x18x4xi32>,
    %c0_i32_9 = arith.constant 0 : i32
    %41 = vector.broadcast %c0_i32_9 : i32 to vector<18x1x4xi32>
    %c0_10 = arith.constant 0 : index
    %c0_11 = arith.constant 0 : index
    %c0_12 = arith.constant 0 : index
    %42 = vector.load %arg6[%c0_10, %c0_11, %c0_12] : memref<18x18x4xi32, #tpu.memory_space<vmem>>, vector<18x1x4xi32>
    tpu.vector_store %arg6[%c0_10, %c0_11, %c0_12], %41 {strides = array<i32>} : memref<18x18x4xi32, #tpu.memory_space<vmem>>, vector<18x1x4xi32>,
    %c0_13 = arith.constant 0 : index
    %c17_14 = arith.constant 17 : index
    %c0_15 = arith.constant 0 : index
    %43 = vector.load %arg6[%c0_13, %c17_14, %c0_15] : memref<18x18x4xi32, #tpu.memory_space<vmem>>, vector<18x1x4xi32>
    tpu.vector_store %arg6[%c0_13, %c17_14, %c0_15], %41 {strides = array<i32>} : memref<18x18x4xi32, #tpu.memory_space<vmem>>, vector<18x1x4xi32>,
    %c1 = arith.constant 1 : index
    %c1_16 = arith.constant 1 : index
    %c0_17 = arith.constant 0 : index
    %44 = vector.load %arg6[%c1, %c1_16, %c0_17] : memref<18x18x4xi32, #tpu.memory_space<vmem>>, vector<16x16x4xi32>
    tpu.vector_store %arg6[%c1, %c1_16, %c0_17], %37 {strides = array<i32>} : memref<18x18x4xi32, #tpu.memory_space<vmem>>, vector<16x16x4xi32>,
    %c0_18 = arith.constant 0 : index
    %c0_19 = arith.constant 0 : index
    %c0_20 = arith.constant 0 : index
    %45 = vector.load %arg6[%c0_18, %c0_19, %c0_20] : memref<18x18x4xi32, #tpu.memory_space<vmem>>, vector<16x18x4xi32>
    %c1_21 = arith.constant 1 : index
    %c0_22 = arith.constant 0 : index
    %c0_23 = arith.constant 0 : index
    %46 = vector.load %arg6[%c1_21, %c0_22, %c0_23] : memref<18x18x4xi32, #tpu.memory_space<vmem>>, vector<16x18x4xi32>
    %47 = arith.maxsi %45, %46 : vector<16x18x4xi32>
    %c2 = arith.constant 2 : index
    %c0_24 = arith.constant 0 : index
    %c0_25 = arith.constant 0 : index
    %48 = vector.load %arg6[%c2, %c0_24, %c0_25] : memref<18x18x4xi32, #tpu.memory_space<vmem>>, vector<16x18x4xi32>
    %49 = arith.maxsi %47, %48 : vector<16x18x4xi32>
    %50 = vector.extract_strided_slice %49 {offsets = [0, 0, 0], sizes = [16, 16, 4], strides = [1, 1, 1]} : vector<16x18x4xi32> to vector<16x16x4xi32>
    %51 = vector.extract_strided_slice %49 {offsets = [0, 1, 0], sizes = [16, 16, 4], strides = [1, 1, 1]} : vector<16x18x4xi32> to vector<16x16x4xi32>
    %52 = arith.maxsi %50, %51 : vector<16x16x4xi32>
    %53 = vector.extract_strided_slice %49 {offsets = [0, 2, 0], sizes = [16, 16, 4], strides = [1, 1, 1]} : vector<16x18x4xi32> to vector<16x16x4xi32>
    %54 = arith.maxsi %52, %53 : vector<16x16x4xi32>
    %c0_i32_26 = arith.constant 0 : i32
    %55 = vector.broadcast %c0_i32_26 : i32 to vector<16x16x4xi32>
    %56 = arith.cmpi eq, %54, %55 : vector<16x16x4xi32>
    %c0_27 = arith.constant 0 : index
    %c0_28 = arith.constant 0 : index
    %c0_29 = arith.constant 0 : index
    %c0_30 = arith.constant 0 : index
    %57 = vector.load %arg3[%c0_27, %c0_28, %c0_29, %c0_30] : memref<1x16x16x4xf32, #tpu.memory_space<vmem>>, vector<1x16x16x4xf32>
    %58 = vector.shape_cast %57 : vector<1x16x16x4xf32> to vector<16x16x4xf32>
    %cst = arith.constant 0.000000e+00 : f32
    %59 = vector.broadcast %cst : f32 to vector<16x16x4xf32>
    %60 = arith.select %56, %58, %59 : vector<16x16x4xi1>, vector<16x16x4xf32>
    %c0_31 = arith.constant 0 : index
    %c0_32 = arith.constant 0 : index
    %c0_33 = arith.constant 0 : index
    %c0_34 = arith.constant 0 : index
    %61 = vector.load %arg4[%c0_31, %c0_32, %c0_33, %c0_34] : memref<1x16x16x4xf32, #tpu.memory_space<vmem>>, vector<1x16x16x4xf32>
    %62 = vector.shape_cast %61 : vector<1x16x16x4xf32> to vector<16x16x4xf32>
    %63 = vector.shape_cast %60 : vector<16x16x4xf32> to vector<1x16x16x4xf32>
    tpu.vector_store %arg4[%c0_31, %c0_32, %c0_33, %c0_34], %63 {strides = array<i32>} : memref<1x16x16x4xf32, #tpu.memory_space<vmem>>, vector<1x16x16x4xf32>,
    %cst_35 = arith.constant 1.000000e+00 : f32
    %cst_36 = arith.constant 0.000000e+00 : f32
    %64 = vector.broadcast %cst_35 : f32 to vector<16x16x4xf32>
    %65 = vector.broadcast %cst_36 : f32 to vector<16x16x4xf32>
    %66 = arith.select %56, %64, %65 : vector<16x16x4xi1>, vector<16x16x4xf32>
    %67 = vector.shape_cast %66 : vector<16x16x4xf32> to vector<1x16x16x4xf32>
    %cst_37 = arith.constant dense<0.000000e+00> : vector<1xf32>
    %68 = vector.multi_reduction <add>, %67, %cst_37 [1, 2, 3] : vector<1x16x16x4xf32> to vector<1xf32>
    %69 = vector.shape_cast %68 : vector<1xf32> to vector<1x1x1x1xf32>
    %70 = vector.extract %69[0, 0, 0, 0] : f32 from vector<1x1x1x1xf32>
    %71 = vector.broadcast %70 : f32 to vector<1x1x1x1xf32>
    %c0_38 = arith.constant 0 : index
    %c0_39 = arith.constant 0 : index
    %c0_40 = arith.constant 0 : index
    %c0_41 = arith.constant 0 : index
    %72 = vector.load %arg5[%c0_38, %c0_39, %c0_40, %c0_41] : memref<1x1x1x1xf32, #tpu.memory_space<vmem>>, vector<1x1x1x1xf32>
    tpu.vector_store %arg5[%c0_38, %c0_39, %c0_40, %c0_41], %71 {strides = array<i32>} : memref<1x1x1x1xf32, #tpu.memory_space<vmem>>, vector<1x1x1x1xf32>,
    return
  }
  func.func @transform_0(%arg0: i32, %arg1: i32, %arg2: memref<1xi32, #tpu.memory_space<smem>>) -> (i32, i32, i32, i32) {
    %c0_i32 = arith.constant 0 : i32
    %c0_i32_0 = arith.constant 0 : i32
    %c0_i32_1 = arith.constant 0 : i32
    return %arg0, %c0_i32, %c0_i32_0, %arg1 : i32, i32, i32, i32
  }
  func.func @transform_1(%arg0: i32, %arg1: i32, %arg2: memref<1xi32, #tpu.memory_space<smem>>) -> (i32, i32, i32, i32) {
    %c0_i32 = arith.constant 0 : i32
    %c0_i32_0 = arith.constant 0 : i32
    %c0_i32_1 = arith.constant 0 : i32
    return %arg0, %c0_i32, %c0_i32_0, %arg1 : i32, i32, i32, i32
  }
  func.func @transform_2(%arg0: i32, %arg1: i32, %arg2: memref<1xi32, #tpu.memory_space<smem>>) -> (i32, i32, i32, i32) {
    %c0_i32 = arith.constant 0 : i32
    %c0_i32_0 = arith.constant 0 : i32
    %c0_i32_1 = arith.constant 0 : i32
    return %arg0, %arg1, %c0_i32, %c0_i32_0 : i32, i32, i32, i32
  }
}

</mosaic_0001>

<llo_original>
// kernel: tpu_custom_call.1
$region0: #{tpu_custom_call.1}
  #allocation0 [shape = 'u32[]', space=smem, size = 0x4, offset = 0x4, fixed_abs, tag = 'smem constant byte address 0x4 - core index']
  #allocation1 [shape = 'u32[144,128]{1,0:T(1,128)}', space=vmem, size = 0x12000, scoped, tag = 'internal scratch']
  #allocation2 [shape = 's32[18,18,4]{2,1,0:T(8,128)}', space=vmem, size = 0x36000, scoped, tag = 'scratch operand']
  #allocation3 [shape = 's32[1]{0}', space=sflag, size = 0x4, scoped, tag = 'scoped memory for tpu_custom_call.1']
  #allocation4 [shape = 's32[1]{0:T(128)S(6)}', space=smem, size = 0x200, scoped, tag = 'prefetched SMEM operand 0']
  %s0 = inlined_call_operand.<no memory space> [shape: s32[1], index: 0, kind: input, shape index: {}]
  %s1 = inlined_call_operand.vmem [shape: f32[2,16,16,4], index: 1, kind: input, shape index: {}]
  %s2 = inlined_call_operand.vmem [shape: f32[2,16,16,4], index: 2, kind: output, shape index: {0}]
  %s3 = inlined_call_operand.vmem [shape: f32[2,1,1,1], index: 3, kind: output, shape index: {1}]
  %4 = xla_tuple %s2, %s3
  %s5 = sld [smem:[#allocation0]]
  $region45: #{tpu_custom_call.1} parent=0
    _
  %s7 = ssub.s32 1, %s5
  %s8 = scalar_select 0, %s7, %s5
  %9 = sst [smem:[#allocation4]] %s0
  loop: start=0, step=1, limit=4
  $region2: #{tpu_custom_call.1} parent=0 // loop_pre_header
    _
  $region3: #{tpu_custom_call.1} parent=0 // loop_header
    %s11 = sphi 0, %s15
    %p12 = scmp.ge.s32.totalorder %s11, 4
    %s18 = sphi 0, %s30
    %s19 = sphi 0, %s26
    %s20 = sphi 0, %s18
    %s21 = sphi 0, %s19
    %s22 = sphi 0, %s20
    %s23 = sphi 0, %s21
    %s35 = sphi 0, %s37
    %s38 = sphi 0, %s35
    %s39 = sphi 0, %s38
    %s55 = sphi 0, %s39
    %s63 = sphi 0, %s65
    %s66 = sphi 0, %s63
    %s67 = sphi 0, %s66
    %s83 = sphi 0, %s67
    %s91 = sphi 0, %s93
    %s94 = sphi 0, %s91
    %s95 = sphi 0, %s94
    %s111 = sphi 0, %s95
  $region4: #{tpu_custom_call.1} parent=0 // loop_header_branch
    %14 = sbr.rel (%p12) target = $region8
  $region5: #{tpu_custom_call.1} parent=0 // loop_body
    %s16 = ssub.s32 %s11, 1
    %s17 = ssub.s32 %s11, 2
    %s24 = sadd.s32 1, %s19
    %p25 = scmp.ge.s32.totalorder %s24, 1
    %s26 = scalar_select %p25, 0, %s24
    %s27 = sadd.s32 1, %s18
    %s28 = scalar_select %p25, %s27, %s18
    %p29 = scmp.ge.s32.totalorder %s28, 2
    %s30 = scalar_select %p29, 0, %s28
    %s31 = ssub.s32 %s18, %s30
    %s32 = ssub.s32 %s19, %s26
    %s33 = sor.u32 %s31, %s32
    %p34 = scmp.eq.s32.totalorder %s33, 0
    %s36 = sadd.s32 %s35, 1
    %s37 = scalar_select %p34, %s35, %s36
    %p40 = pneg %p34
    %p41 = scmp.eq.s32.totalorder %s11, 1
    %p42 = por %p40, %p41
    %p43 = scmp.ne.s32.totalorder %s35, %s38
    %p44 = scmp.eq.s32.totalorder %s11, 0
    %p45 = por %p43, %p44
    %p46 = scmp.ne.s32.totalorder %s35, %s38
    %p47 = scmp.eq.s32.totalorder %s16, 1
    %p48 = por %p46, %p47
    %p49 = scmp.ne.s32.totalorder %s38, %s39
    %p50 = scmp.eq.s32.totalorder %s16, 0
    %p51 = por %p49, %p50
    %p52 = scmp.ne.s32.totalorder %s38, %s39
    %p53 = scmp.eq.s32.totalorder %s17, 1
    %p54 = por %p52, %p53
    %p56 = scmp.ne.s32.totalorder %s39, %s55
    %p57 = scmp.eq.s32.totalorder %s17, 0
    %p58 = por %p56, %p57
    %s59 = ssub.s32 %s18, %s30
    %s60 = ssub.s32 %s19, %s26
    %s61 = sor.u32 %s59, %s60
    %p62 = scmp.eq.s32.totalorder %s61, 0
    %s64 = sadd.s32 %s63, 1
    %s65 = scalar_select %p62, %s63, %s64
    %p68 = pneg %p62
    %p69 = scmp.eq.s32.totalorder %s11, 1
    %p70 = por %p68, %p69
    %p71 = scmp.ne.s32.totalorder %s63, %s66
    %p72 = scmp.eq.s32.totalorder %s11, 0
    %p73 = por %p71, %p72
    %p74 = scmp.ne.s32.totalorder %s63, %s66
    %p75 = scmp.eq.s32.totalorder %s16, 1
    %p76 = por %p74, %p75
    %p77 = scmp.ne.s32.totalorder %s66, %s67
    %p78 = scmp.eq.s32.totalorder %s16, 0
    %p79 = por %p77, %p78
    %p80 = scmp.ne.s32.totalorder %s66, %s67
    %p81 = scmp.eq.s32.totalorder %s17, 1
    %p82 = por %p80, %p81
    %p84 = scmp.ne.s32.totalorder %s67, %s83
    %p85 = scmp.eq.s32.totalorder %s17, 0
    %p86 = por %p84, %p85
    %s87 = ssub.s32 %s18, %s30
    %s88 = ssub.s32 %s19, %s26
    %s89 = sor.u32 %s87, %s88
    %p90 = scmp.eq.s32.totalorder %s89, 0
    %s92 = sadd.s32 %s91, 1
    %s93 = scalar_select %p90, %s91, %s92
    %p96 = pneg %p90
    %p97 = scmp.eq.s32.totalorder %s11, 1
    %p98 = por %p96, %p97
    %p99 = scmp.ne.s32.totalorder %s91, %s94
    %p100 = scmp.eq.s32.totalorder %s11, 0
    %p101 = por %p99, %p100
    %p102 = scmp.ne.s32.totalorder %s91, %s94
    %p103 = scmp.eq.s32.totalorder %s16, 1
    %p104 = por %p102, %p103
    %p105 = scmp.ne.s32.totalorder %s94, %s95
    %p106 = scmp.eq.s32.totalorder %s16, 0
    %p107 = por %p105, %p106
    %p108 = scmp.ne.s32.totalorder %s94, %s95
    %p109 = scmp.eq.s32.totalorder %s17, 1
    %p110 = por %p108, %p109
    %p112 = scmp.ne.s32.totalorder %s95, %s111
    %p113 = scmp.eq.s32.totalorder %s17, 0
    %p114 = por %p112, %p113
    %p115 = scmp.le.s32.totalorder 1, %s11
    %p116 = scmp.lt.s32.totalorder %s11, 3
    %p117 = pnand %p115, %p116
    %p118 = pneg %p117
    // Predicated region
    $region9: #{tpu_custom_call.1} parent=5 // pred_check
      _
    $region10: #{tpu_custom_call.1} parent=5 // pred_check_branch
      %120 = sbr.rel (%p117) target = $region12
    $region11: #{tpu_custom_call.1} parent=5 // pred_region
      %s121 = ssub.s32 %s11, 1
    $region12: #{tpu_custom_call.1} parent=5 // pred_fallthru
      _
    %p122 = scmp.lt.s32.totalorder %s11, 2
    // Predicated region
    $region13: #{tpu_custom_call.1} parent=5 // pred_check
      %p123 = pneg %p122
    $region14: #{tpu_custom_call.1} parent=5 // pred_check_branch
      %125 = sbr.rel (%p123) target = $region16
    $region15: #{tpu_custom_call.1} parent=5 // pred_region
      // Predicated region
      $region17: #{tpu_custom_call.1} parent=15 // pred_check
        %p126 = pneg %p45
      $region18: #{tpu_custom_call.1} parent=15 // pred_check_branch
        %128 = sbr.rel (%p126) target = $region20
      $region19: #{tpu_custom_call.1} parent=15 // pred_region
        %p129 = scmp.lt.s32.totalorder %s18, 1
        %s130 = scalar_select %p129, %s18, 1
        %p131 = scmp.lt.s32.totalorder %s19, 0
        %s132 = scalar_select %p131, %s19, 0
        %s133 = smul.addr %s130, 32
        %s134 = sadd.s32 %s132, %s133
        %s135 = smul.addr %s134, 8
        %s136 = scalar_lea.vmem %s1, %s135
      $region20: #{tpu_custom_call.1} parent=15 // pred_fallthru
        _
    $region16: #{tpu_custom_call.1} parent=5 // pred_fallthru
      _
    %p137 = scmp.le.s32.totalorder 1, %s11
    %p138 = scmp.lt.s32.totalorder %s11, 3
    %p139 = pnand %p137, %p138
    %p140 = pneg %p139
    // Predicated region
    $region21: #{tpu_custom_call.1} parent=5 // pred_check
      _
    $region22: #{tpu_custom_call.1} parent=5 // pred_check_branch
      %142 = sbr.rel (%p139) target = $region24
    $region23: #{tpu_custom_call.1} parent=5 // pred_region
      %s143 = ssub.s32 %s11, 1
      %p144 = scmp.lt.s32.totalorder %s20, 1
      %s145 = scalar_select %p144, %s20, 1
      %p146 = scmp.lt.s32.totalorder %s21, 0
      %s147 = scalar_select %p146, %s21, 0
      %s148 = smul.addr %s145, 32
      %s149 = sadd.s32 %s147, %s148
      %s150 = smul.addr %s149, 8
      %s151 = scalar_lea.vmem %s1, %s150
      %p152 = pneg %p51
      %p153 = pneg %p48
      %p154 = pneg %p79
      %p155 = pneg %p76
      %p156 = scmp.lt.s32.totalorder %s20, 1
      %s157 = scalar_select %p156, %s20, 1
      %p158 = scmp.lt.s32.totalorder %s21, 0
      %s159 = scalar_select %p158, %s21, 0
      %s160 = smul.addr %s157, 32
      %s161 = sadd.s32 %s159, %s160
      %s162 = smul.addr %s161, 8
      %s163 = scalar_lea.vmem %s2, %s162
      %p164 = pneg %p107
      %p165 = pneg %p104
      %p166 = scmp.lt.s32.totalorder %s20, 1
      %s167 = scalar_select %p166, %s20, 1
      %p168 = scmp.lt.s32.totalorder %s21, 0
      %s169 = scalar_select %p168, %s21, 0
      %s170 = sadd.s32 %s169, %s167
      %s171 = scalar_lea.vmem %s3, %s170
      %p172 = scmp.lt.s32.totalorder %s20, 1
      %s173 = scalar_select %p172, %s20, 1
      %p174 = scmp.lt.s32.totalorder %s21, 0
      %s175 = scalar_select %p174, %s21, 0
      %s176 = smul.addr %s173, 32
      %s177 = sadd.s32 %s175, %s176
      %s178 = smul.addr %s177, 8
      %s179 = scalar_lea.vmem %s1, %s178
      %p180 = scmp.lt.s32.totalorder %s20, 1
      %s181 = scalar_select %p180, %s20, 1
      %p182 = scmp.lt.s32.totalorder %s21, 0
      %s183 = scalar_select %p182, %s21, 0
      %s184 = smul.addr %s181, 32
      %s185 = sadd.s32 %s183, %s184
      %s186 = smul.addr %s185, 8
      %s187 = scalar_lea.vmem %s2, %s186
      %p188 = scmp.lt.s32.totalorder %s20, 1
      %s189 = scalar_select %p188, %s20, 1
      %p190 = scmp.lt.s32.totalorder %s21, 0
      %s191 = scalar_select %p190, %s21, 0
      %s192 = sadd.s32 %s191, %s189
      %s193 = scalar_lea.vmem %s3, %s192
      %v194 = vlaneseq
      %v195 = vshrl.u32 %v194, 7
      %v196 = vadd.s32 %v195, 8
      %v197 = vlaneseq
      %v198 = vand.u32 %v197, 127
      %s199 = smul.u32 %s20, 16
      %v200 = vstv %s199
      %v201 = vadd.s32 %v200, 1
      %v202 = vadd.s32 %v200, 2
      %v203 = vadd.s32 %v200, 3
      %v204 = vadd.s32 %v200, 4
      %v205 = vadd.s32 %v200, 5
      %v206 = vadd.s32 %v200, 6
      %v207 = vadd.s32 %v200, 7
      %v208 = vadd.s32 %v200, 8
      %v209 = vadd.s32 %v200, 9
      %v210 = vadd.s32 %v200, 10
      %v211 = vadd.s32 %v200, 11
      %v212 = vadd.s32 %v200, 12
      %v213 = vadd.s32 %v200, 13
      %v214 = vadd.s32 %v200, 14
      %v215 = vadd.s32 %v200, 15
      %v216 = vmul.u32 %v200, 16
      %v217 = vmul.u32 %v201, 16
      %v218 = vmul.u32 %v202, 16
      %v219 = vmul.u32 %v203, 16
      %v220 = vmul.u32 %v204, 16
      %v221 = vmul.u32 %v205, 16
      %v222 = vmul.u32 %v206, 16
      %v223 = vmul.u32 %v207, 16
      %v224 = vmul.u32 %v208, 16
      %v225 = vmul.u32 %v209, 16
      %v226 = vmul.u32 %v210, 16
      %v227 = vmul.u32 %v211, 16
      %v228 = vmul.u32 %v212, 16
      %v229 = vmul.u32 %v213, 16
      %v230 = vmul.u32 %v214, 16
      %v231 = vmul.u32 %v215, 16
      %v232 = vadd.s32 %v216, %v195
      %v233 = vadd.s32 %v216, %v196
      %v234 = vadd.s32 %v217, %v195
      %v235 = vadd.s32 %v217, %v196
      %v236 = vadd.s32 %v218, %v195
      %v237 = vadd.s32 %v218, %v196
      %v238 = vadd.s32 %v219, %v195
      %v239 = vadd.s32 %v219, %v196
      %v240 = vadd.s32 %v220, %v195
      %v241 = vadd.s32 %v220, %v196
      %v242 = vadd.s32 %v221, %v195
      %v243 = vadd.s32 %v221, %v196
      %v244 = vadd.s32 %v222, %v195
      %v245 = vadd.s32 %v222, %v196
      %v246 = vadd.s32 %v223, %v195
      %v247 = vadd.s32 %v223, %v196
      %v248 = vadd.s32 %v224, %v195
      %v249 = vadd.s32 %v224, %v196
      %v250 = vadd.s32 %v225, %v195
      %v251 = vadd.s32 %v225, %v196
      %v252 = vadd.s32 %v226, %v195
      %v253 = vadd.s32 %v226, %v196
      %v254 = vadd.s32 %v227, %v195
      %v255 = vadd.s32 %v227, %v196
      %v256 = vadd.s32 %v228, %v195
      %v257 = vadd.s32 %v228, %v196
      %v258 = vadd.s32 %v229, %v195
      %v259 = vadd.s32 %v229, %v196
      %v260 = vadd.s32 %v230, %v195
      %v261 = vadd.s32 %v230, %v196
      %v262 = vadd.s32 %v231, %v195
      %v263 = vadd.s32 %v231, %v196
      %v264 = vmul.u32 %v232, 4
      %v265 = vmul.u32 %v233, 4
      %v266 = vmul.u32 %v234, 4
      %v267 = vmul.u32 %v235, 4
      %v268 = vmul.u32 %v236, 4
      %v269 = vmul.u32 %v237, 4
      %v270 = vmul.u32 %v238, 4
      %v271 = vmul.u32 %v239, 4
      %v272 = vmul.u32 %v240, 4
      %v273 = vmul.u32 %v241, 4
      %v274 = vmul.u32 %v242, 4
      %v275 = vmul.u32 %v243, 4
      %v276 = vmul.u32 %v244, 4
      %v277 = vmul.u32 %v245, 4
      %v278 = vmul.u32 %v246, 4
      %v279 = vmul.u32 %v247, 4
      %v280 = vmul.u32 %v248, 4
      %v281 = vmul.u32 %v249, 4
      %v282 = vmul.u32 %v250, 4
      %v283 = vmul.u32 %v251, 4
      %v284 = vmul.u32 %v252, 4
      %v285 = vmul.u32 %v253, 4
      %v286 = vmul.u32 %v254, 4
      %v287 = vmul.u32 %v255, 4
      %v288 = vmul.u32 %v256, 4
      %v289 = vmul.u32 %v257, 4
      %v290 = vmul.u32 %v258, 4
      %v291 = vmul.u32 %v259, 4
      %v292 = vmul.u32 %v260, 4
      %v293 = vmul.u32 %v261, 4
      %v294 = vmul.u32 %v262, 4
      %v295 = vmul.u32 %v263, 4
      %s296 = smul.u32 %s21, 4
      %v297 = vstv %s296
      %v298 = vadd.s32 %v297, %v198
      %v299 = vadd.s32 %v264, %v298
      %v300 = vadd.s32 %v265, %v298
      %v301 = vadd.s32 %v266, %v298
      %v302 = vadd.s32 %v267, %v298
      %v303 = vadd.s32 %v268, %v298
      %v304 = vadd.s32 %v269, %v298
      %v305 = vadd.s32 %v270, %v298
      %v306 = vadd.s32 %v271, %v298
      %v307 = vadd.s32 %v272, %v298
      %v308 = vadd.s32 %v273, %v298
      %v309 = vadd.s32 %v274, %v298
      %v310 = vadd.s32 %v275, %v298
      %v311 = vadd.s32 %v276, %v298
      %v312 = vadd.s32 %v277, %v298
      %v313 = vadd.s32 %v278, %v298
      %v314 = vadd.s32 %v279, %v298
      %v315 = vadd.s32 %v280, %v298
      %v316 = vadd.s32 %v281, %v298
      %v317 = vadd.s32 %v282, %v298
      %v318 = vadd.s32 %v283, %v298
      %v319 = vadd.s32 %v284, %v298
      %v320 = vadd.s32 %v285, %v298
      %v321 = vadd.s32 %v286, %v298
      %v322 = vadd.s32 %v287, %v298
      %v323 = vadd.s32 %v288, %v298
      %v324 = vadd.s32 %v289, %v298
      %v325 = vadd.s32 %v290, %v298
      %v326 = vadd.s32 %v291, %v298
      %v327 = vadd.s32 %v292, %v298
      %v328 = vadd.s32 %v293, %v298
      %v329 = vadd.s32 %v294, %v298
      %v330 = vadd.s32 %v295, %v298
      %s331 = sld [smem:[#allocation4]]
      %s332 = smul.u32 %s331, 1664525
      %s333 = sadd.s32 %s332, 1013904223
      %v334 = vstv %s333
      %v335 = vxor.u32 %v299, %v334
      %v336 = vxor.u32 %v300, %v334
      %v337 = vxor.u32 %v301, %v334
      %v338 = vxor.u32 %v302, %v334
      %v339 = vxor.u32 %v303, %v334
      %v340 = vxor.u32 %v304, %v334
      %v341 = vxor.u32 %v305, %v334
      %v342 = vxor.u32 %v306, %v334
      %v343 = vxor.u32 %v307, %v334
      %v344 = vxor.u32 %v308, %v334
      %v345 = vxor.u32 %v309, %v334
      %v346 = vxor.u32 %v310, %v334
      %v347 = vxor.u32 %v311, %v334
      %v348 = vxor.u32 %v312, %v334
      %v349 = vxor.u32 %v313, %v334
      %v350 = vxor.u32 %v314, %v334
      %v351 = vxor.u32 %v315, %v334
      %v352 = vxor.u32 %v316, %v334
      %v353 = vxor.u32 %v317, %v334
      %v354 = vxor.u32 %v318, %v334
      %v355 = vxor.u32 %v319, %v334
      %v356 = vxor.u32 %v320, %v334
      %v357 = vxor.u32 %v321, %v334
      %v358 = vxor.u32 %v322, %v334
      %v359 = vxor.u32 %v323, %v334
      %v360 = vxor.u32 %v324, %v334
      %v361 = vxor.u32 %v325, %v334
      %v362 = vxor.u32 %v326, %v334
      %v363 = vxor.u32 %v327, %v334
      %v364 = vxor.u32 %v328, %v334
      %v365 = vxor.u32 %v329, %v334
      %v366 = vxor.u32 %v330, %v334
      %v367 = vshrl.u32 %v335, 16
      %v368 = vshrl.u32 %v336, 16
      %v369 = vshrl.u32 %v337, 16
      %v370 = vshrl.u32 %v338, 16
      %v371 = vshrl.u32 %v339, 16
      %v372 = vshrl.u32 %v340, 16
      %v373 = vshrl.u32 %v341, 16
      %v374 = vshrl.u32 %v342, 16
      %v375 = vshrl.u32 %v343, 16
      %v376 = vshrl.u32 %v344, 16
      %v377 = vshrl.u32 %v345, 16
      %v378 = vshrl.u32 %v346, 16
      %v379 = vshrl.u32 %v347, 16
      %v380 = vshrl.u32 %v348, 16
      %v381 = vshrl.u32 %v349, 16
      %v382 = vshrl.u32 %v350, 16
      %v383 = vshrl.u32 %v351, 16
      %v384 = vshrl.u32 %v352, 16
      %v385 = vshrl.u32 %v353, 16
      %v386 = vshrl.u32 %v354, 16
      %v387 = vshrl.u32 %v355, 16
      %v388 = vshrl.u32 %v356, 16
      %v389 = vshrl.u32 %v357, 16
      %v390 = vshrl.u32 %v358, 16
      %v391 = vshrl.u32 %v359, 16
      %v392 = vshrl.u32 %v360, 16
      %v393 = vshrl.u32 %v361, 16
      %v394 = vshrl.u32 %v362, 16
      %v395 = vshrl.u32 %v363, 16
      %v396 = vshrl.u32 %v364, 16
      %v397 = vshrl.u32 %v365, 16
      %v398 = vshrl.u32 %v366, 16
      %v399 = vxor.u32 %v335, %v367
      %v400 = vxor.u32 %v336, %v368
      %v401 = vxor.u32 %v337, %v369
      %v402 = vxor.u32 %v338, %v370
      %v403 = vxor.u32 %v339, %v371
      %v404 = vxor.u32 %v340, %v372
      %v405 = vxor.u32 %v341, %v373
      %v406 = vxor.u32 %v342, %v374
      %v407 = vxor.u32 %v343, %v375
      %v408 = vxor.u32 %v344, %v376
      %v409 = vxor.u32 %v345, %v377
      %v410 = vxor.u32 %v346, %v378
      %v411 = vxor.u32 %v347, %v379
      %v412 = vxor.u32 %v348, %v380
      %v413 = vxor.u32 %v349, %v381
      %v414 = vxor.u32 %v350, %v382
      %v415 = vxor.u32 %v351, %v383
      %v416 = vxor.u32 %v352, %v384
      %v417 = vxor.u32 %v353, %v385
      %v418 = vxor.u32 %v354, %v386
      %v419 = vxor.u32 %v355, %v387
      %v420 = vxor.u32 %v356, %v388
      %v421 = vxor.u32 %v357, %v389
      %v422 = vxor.u32 %v358, %v390
      %v423 = vxor.u32 %v359, %v391
      %v424 = vxor.u32 %v360, %v392
      %v425 = vxor.u32 %v361, %v393
      %v426 = vxor.u32 %v362, %v394
      %v427 = vxor.u32 %v363, %v395
      %v428 = vxor.u32 %v364, %v396
      %v429 = vxor.u32 %v365, %v397
      %v430 = vxor.u32 %v366, %v398
      %v431 = vmul.u32 %v399, 2146121005
      %v432 = vmul.u32 %v400, 2146121005
      %v433 = vmul.u32 %v401, 2146121005
      %v434 = vmul.u32 %v402, 2146121005
      %v435 = vmul.u32 %v403, 2146121005
      %v436 = vmul.u32 %v404, 2146121005
      %v437 = vmul.u32 %v405, 2146121005
      %v438 = vmul.u32 %v406, 2146121005
      %v439 = vmul.u32 %v407, 2146121005
      %v440 = vmul.u32 %v408, 2146121005
      %v441 = vmul.u32 %v409, 2146121005
      %v442 = vmul.u32 %v410, 2146121005
      %v443 = vmul.u32 %v411, 2146121005
      %v444 = vmul.u32 %v412, 2146121005
      %v445 = vmul.u32 %v413, 2146121005
      %v446 = vmul.u32 %v414, 2146121005
      %v447 = vmul.u32 %v415, 2146121005
      %v448 = vmul.u32 %v416, 2146121005
      %v449 = vmul.u32 %v417, 2146121005
      %v450 = vmul.u32 %v418, 2146121005
      %v451 = vmul.u32 %v419, 2146121005
      %v452 = vmul.u32 %v420, 2146121005
      %v453 = vmul.u32 %v421, 2146121005
      %v454 = vmul.u32 %v422, 2146121005
      %v455 = vmul.u32 %v423, 2146121005
      %v456 = vmul.u32 %v424, 2146121005
      %v457 = vmul.u32 %v425, 2146121005
      %v458 = vmul.u32 %v426, 2146121005
      %v459 = vmul.u32 %v427, 2146121005
      %v460 = vmul.u32 %v428, 2146121005
      %v461 = vmul.u32 %v429, 2146121005
      %v462 = vmul.u32 %v430, 2146121005
      %v463 = vshrl.u32 %v431, 15
      %v464 = vshrl.u32 %v432, 15
      %v465 = vshrl.u32 %v433, 15
      %v466 = vshrl.u32 %v434, 15
      %v467 = vshrl.u32 %v435, 15
      %v468 = vshrl.u32 %v436, 15
      %v469 = vshrl.u32 %v437, 15
      %v470 = vshrl.u32 %v438, 15
      %v471 = vshrl.u32 %v439, 15
      %v472 = vshrl.u32 %v440, 15
      %v473 = vshrl.u32 %v441, 15
      %v474 = vshrl.u32 %v442, 15
      %v475 = vshrl.u32 %v443, 15
      %v476 = vshrl.u32 %v444, 15
      %v477 = vshrl.u32 %v445, 15
      %v478 = vshrl.u32 %v446, 15
      %v479 = vshrl.u32 %v447, 15
      %v480 = vshrl.u32 %v448, 15
      %v481 = vshrl.u32 %v449, 15
      %v482 = vshrl.u32 %v450, 15
      %v483 = vshrl.u32 %v451, 15
      %v484 = vshrl.u32 %v452, 15
      %v485 = vshrl.u32 %v453, 15
      %v486 = vshrl.u32 %v454, 15
      %v487 = vshrl.u32 %v455, 15
      %v488 = vshrl.u32 %v456, 15
      %v489 = vshrl.u32 %v457, 15
      %v490 = vshrl.u32 %v458, 15
      %v491 = vshrl.u32 %v459, 15
      %v492 = vshrl.u32 %v460, 15
      %v493 = vshrl.u32 %v461, 15
      %v494 = vshrl.u32 %v462, 15
      %v495 = vxor.u32 %v431, %v463
      %v496 = vxor.u32 %v432, %v464
      %v497 = vxor.u32 %v433, %v465
      %v498 = vxor.u32 %v434, %v466
      %v499 = vxor.u32 %v435, %v467
      %v500 = vxor.u32 %v436, %v468
      %v501 = vxor.u32 %v437, %v469
      %v502 = vxor.u32 %v438, %v470
      %v503 = vxor.u32 %v439, %v471
      %v504 = vxor.u32 %v440, %v472
      %v505 = vxor.u32 %v441, %v473
      %v506 = vxor.u32 %v442, %v474
      %v507 = vxor.u32 %v443, %v475
      %v508 = vxor.u32 %v444, %v476
      %v509 = vxor.u32 %v445, %v477
      %v510 = vxor.u32 %v446, %v478
      %v511 = vxor.u32 %v447, %v479
      %v512 = vxor.u32 %v448, %v480
      %v513 = vxor.u32 %v449, %v481
      %v514 = vxor.u32 %v450, %v482
      %v515 = vxor.u32 %v451, %v483
      %v516 = vxor.u32 %v452, %v484
      %v517 = vxor.u32 %v453, %v485
      %v518 = vxor.u32 %v454, %v486
      %v519 = vxor.u32 %v455, %v487
      %v520 = vxor.u32 %v456, %v488
      %v521 = vxor.u32 %v457, %v489
      %v522 = vxor.u32 %v458, %v490
      %v523 = vxor.u32 %v459, %v491
      %v524 = vxor.u32 %v460, %v492
      %v525 = vxor.u32 %v461, %v493
      %v526 = vxor.u32 %v462, %v494
      %v527 = vmul.u32 %v495, 2221713035
      %v528 = vmul.u32 %v496, 2221713035
      %v529 = vmul.u32 %v497, 2221713035
      %v530 = vmul.u32 %v498, 2221713035
      %v531 = vmul.u32 %v499, 2221713035
      %v532 = vmul.u32 %v500, 2221713035
      %v533 = vmul.u32 %v501, 2221713035
      %v534 = vmul.u32 %v502, 2221713035
      %v535 = vmul.u32 %v503, 2221713035
      %v536 = vmul.u32 %v504, 2221713035
      %v537 = vmul.u32 %v505, 2221713035
      %v538 = vmul.u32 %v506, 2221713035
      %v539 = vmul.u32 %v507, 2221713035
      %v540 = vmul.u32 %v508, 2221713035
      %v541 = vmul.u32 %v509, 2221713035
      %v542 = vmul.u32 %v510, 2221713035
      %v543 = vmul.u32 %v511, 2221713035
      %v544 = vmul.u32 %v512, 2221713035
      %v545 = vmul.u32 %v513, 2221713035
      %v546 = vmul.u32 %v514, 2221713035
      %v547 = vmul.u32 %v515, 2221713035
      %v548 = vmul.u32 %v516, 2221713035
      %v549 = vmul.u32 %v517, 2221713035
      %v550 = vmul.u32 %v518, 2221713035
      %v551 = vmul.u32 %v519, 2221713035
      %v552 = vmul.u32 %v520, 2221713035
      %v553 = vmul.u32 %v521, 2221713035
      %v554 = vmul.u32 %v522, 2221713035
      %v555 = vmul.u32 %v523, 2221713035
      %v556 = vmul.u32 %v524, 2221713035
      %v557 = vmul.u32 %v525, 2221713035
      %v558 = vmul.u32 %v526, 2221713035
      %v559 = vshrl.u32 %v527, 16
      %v560 = vshrl.u32 %v528, 16
      %v561 = vshrl.u32 %v529, 16
      %v562 = vshrl.u32 %v530, 16
      %v563 = vshrl.u32 %v531, 16
      %v564 = vshrl.u32 %v532, 16
      %v565 = vshrl.u32 %v533, 16
      %v566 = vshrl.u32 %v534, 16
      %v567 = vshrl.u32 %v535, 16
      %v568 = vshrl.u32 %v536, 16
      %v569 = vshrl.u32 %v537, 16
      %v570 = vshrl.u32 %v538, 16
      %v571 = vshrl.u32 %v539, 16
      %v572 = vshrl.u32 %v540, 16
      %v573 = vshrl.u32 %v541, 16
      %v574 = vshrl.u32 %v542, 16
      %v575 = vshrl.u32 %v543, 16
      %v576 = vshrl.u32 %v544, 16
      %v577 = vshrl.u32 %v545, 16
      %v578 = vshrl.u32 %v546, 16
      %v579 = vshrl.u32 %v547, 16
      %v580 = vshrl.u32 %v548, 16
      %v581 = vshrl.u32 %v549, 16
      %v582 = vshrl.u32 %v550, 16
      %v583 = vshrl.u32 %v551, 16
      %v584 = vshrl.u32 %v552, 16
      %v585 = vshrl.u32 %v553, 16
      %v586 = vshrl.u32 %v554, 16
      %v587 = vshrl.u32 %v555, 16
      %v588 = vshrl.u32 %v556, 16
      %v589 = vshrl.u32 %v557, 16
      %v590 = vshrl.u32 %v558, 16
      %v591 = vxor.u32 %v527, %v559
      %v592 = vxor.u32 %v528, %v560
      %v593 = vxor.u32 %v529, %v561
      %v594 = vxor.u32 %v530, %v562
      %v595 = vxor.u32 %v531, %v563
      %v596 = vxor.u32 %v532, %v564
      %v597 = vxor.u32 %v533, %v565
      %v598 = vxor.u32 %v534, %v566
      %v599 = vxor.u32 %v535, %v567
      %v600 = vxor.u32 %v536, %v568
      %v601 = vxor.u32 %v537, %v569
      %v602 = vxor.u32 %v538, %v570
      %v603 = vxor.u32 %v539, %v571
      %v604 = vxor.u32 %v540, %v572
      %v605 = vxor.u32 %v541, %v573
      %v606 = vxor.u32 %v542, %v574
      %v607 = vxor.u32 %v543, %v575
      %v608 = vxor.u32 %v544, %v576
      %v609 = vxor.u32 %v545, %v577
      %v610 = vxor.u32 %v546, %v578
      %v611 = vxor.u32 %v547, %v579
      %v612 = vxor.u32 %v548, %v580
      %v613 = vxor.u32 %v549, %v581
      %v614 = vxor.u32 %v550, %v582
      %v615 = vxor.u32 %v551, %v583
      %v616 = vxor.u32 %v552, %v584
      %v617 = vxor.u32 %v553, %v585
      %v618 = vxor.u32 %v554, %v586
      %v619 = vxor.u32 %v555, %v587
      %v620 = vxor.u32 %v556, %v588
      %v621 = vxor.u32 %v557, %v589
      %v622 = vxor.u32 %v558, %v590
      %v623 = vshrl.u32 %v591, 1
      %v624 = vshrl.u32 %v592, 1
      %v625 = vshrl.u32 %v593, 1
      %v626 = vshrl.u32 %v594, 1
      %v627 = vshrl.u32 %v595, 1
      %v628 = vshrl.u32 %v596, 1
      %v629 = vshrl.u32 %v597, 1
      %v630 = vshrl.u32 %v598, 1
      %v631 = vshrl.u32 %v599, 1
      %v632 = vshrl.u32 %v600, 1
      %v633 = vshrl.u32 %v601, 1
      %v634 = vshrl.u32 %v602, 1
      %v635 = vshrl.u32 %v603, 1
      %v636 = vshrl.u32 %v604, 1
      %v637 = vshrl.u32 %v605, 1
      %v638 = vshrl.u32 %v606, 1
      %v639 = vshrl.u32 %v607, 1
      %v640 = vshrl.u32 %v608, 1
      %v641 = vshrl.u32 %v609, 1
      %v642 = vshrl.u32 %v610, 1
      %v643 = vshrl.u32 %v611, 1
      %v644 = vshrl.u32 %v612, 1
      %v645 = vshrl.u32 %v613, 1
      %v646 = vshrl.u32 %v614, 1
      %v647 = vshrl.u32 %v615, 1
      %v648 = vshrl.u32 %v616, 1
      %v649 = vshrl.u32 %v617, 1
      %v650 = vshrl.u32 %v618, 1
      %v651 = vshrl.u32 %v619, 1
      %v652 = vshrl.u32 %v620, 1
      %v653 = vshrl.u32 %v621, 1
      %v654 = vshrl.u32 %v622, 1
      %vm655 = vcmp.lt.s32.totalorder %v623, 31165295
      %vm656 = vcmp.lt.s32.totalorder %v624, 31165295
      %vm657 = vcmp.lt.s32.totalorder %v625, 31165295
      %vm658 = vcmp.lt.s32.totalorder %v626, 31165295
      %vm659 = vcmp.lt.s32.totalorder %v627, 31165295
      %vm660 = vcmp.lt.s32.totalorder %v628, 31165295
      %vm661 = vcmp.lt.s32.totalorder %v629, 31165295
      %vm662 = vcmp.lt.s32.totalorder %v630, 31165295
      %vm663 = vcmp.lt.s32.totalorder %v631, 31165295
      %vm664 = vcmp.lt.s32.totalorder %v632, 31165295
      %vm665 = vcmp.lt.s32.totalorder %v633, 31165295
      %vm666 = vcmp.lt.s32.totalorder %v634, 31165295
      %vm667 = vcmp.lt.s32.totalorder %v635, 31165295
      %vm668 = vcmp.lt.s32.totalorder %v636, 31165295
      %vm669 = vcmp.lt.s32.totalorder %v637, 31165295
      %vm670 = vcmp.lt.s32.totalorder %v638, 31165295
      %vm671 = vcmp.lt.s32.totalorder %v639, 31165295
      %vm672 = vcmp.lt.s32.totalorder %v640, 31165295
      %vm673 = vcmp.lt.s32.totalorder %v641, 31165295
      %vm674 = vcmp.lt.s32.totalorder %v642, 31165295
      %vm675 = vcmp.lt.s32.totalorder %v643, 31165295
      %vm676 = vcmp.lt.s32.totalorder %v644, 31165295
      %vm677 = vcmp.lt.s32.totalorder %v645, 31165295
      %vm678 = vcmp.lt.s32.totalorder %v646, 31165295
      %vm679 = vcmp.lt.s32.totalorder %v647, 31165295
      %vm680 = vcmp.lt.s32.totalorder %v648, 31165295
      %vm681 = vcmp.lt.s32.totalorder %v649, 31165295
      %vm682 = vcmp.lt.s32.totalorder %v650, 31165295
      %vm683 = vcmp.lt.s32.totalorder %v651, 31165295
      %vm684 = vcmp.lt.s32.totalorder %v652, 31165295
      %vm685 = vcmp.lt.s32.totalorder %v653, 31165295
      %vm686 = vcmp.lt.s32.totalorder %v654, 31165295
      %v687 = vsel %vm655, 1, 0
      %v688 = vsel %vm656, 1, 0
      %v689 = vsel %vm657, 1, 0
      %v690 = vsel %vm658, 1, 0
      %v691 = vsel %vm659, 1, 0
      %v692 = vsel %vm660, 1, 0
      %v693 = vsel %vm661, 1, 0
      %v694 = vsel %vm662, 1, 0
      %v695 = vsel %vm663, 1, 0
      %v696 = vsel %vm664, 1, 0
      %v697 = vsel %vm665, 1, 0
      %v698 = vsel %vm666, 1, 0
      %v699 = vsel %vm667, 1, 0
      %v700 = vsel %vm668, 1, 0
      %v701 = vsel %vm669, 1, 0
      %v702 = vsel %vm670, 1, 0
      %v703 = vsel %vm671, 1, 0
      %v704 = vsel %vm672, 1, 0
      %v705 = vsel %vm673, 1, 0
      %v706 = vsel %vm674, 1, 0
      %v707 = vsel %vm675, 1, 0
      %v708 = vsel %vm676, 1, 0
      %v709 = vsel %vm677, 1, 0
      %v710 = vsel %vm678, 1, 0
      %v711 = vsel %vm679, 1, 0
      %v712 = vsel %vm680, 1, 0
      %v713 = vsel %vm681, 1, 0
      %v714 = vsel %vm682, 1, 0
      %v715 = vsel %vm683, 1, 0
      %v716 = vsel %vm684, 1, 0
      %v717 = vsel %vm685, 1, 0
      %v718 = vsel %vm686, 1, 0
      %vm719 = vcmask 31744
      %720 = vst.msk [vmem:[#allocation2] sm:$0xff] %vm719, 0
      %721 = vst.msk [vmem:[#allocation2 + $0x8] sm:$0xff] %vm719, 0
      %vm722 = vcmask 25600
      %723 = vst.msk [vmem:[#allocation2 + $0x10] sm:$0x3] %vm722, 0
      %s724 = scalar_lea.vmem [#allocation2], 408
      %725 = vst.msk [vmem:[%s724] sm:$0xff] %vm719, 0
      %726 = vst.msk [vmem:[%s724 + $0x8] sm:$0xff] %vm719, 0
      %727 = vst.msk [vmem:[%s724 + $0x10] sm:$0x3] %vm722, 0
      %vm728 = vcmask 24576
      %729 = vst.msk [vmem:[#allocation2] sm:$0x1] %vm728, 0
      %730 = vst.msk [vmem:[#allocation2 + $0x18] sm:$0x1] %vm728, 0
      %731 = vst.msk [vmem:[#allocation2 + $0x30] sm:$0x1] %vm728, 0
      %732 = vst.msk [vmem:[#allocation2 + $0x48] sm:$0x1] %vm728, 0
      %733 = vst.msk [vmem:[#allocation2 + $0x60] sm:$0x1] %vm728, 0
      %734 = vst.msk [vmem:[#allocation2 + $0x78] sm:$0x1] %vm728, 0
      %735 = vst.msk [vmem:[#allocation2 + $0x90] sm:$0x1] %vm728, 0
      %736 = vst.msk [vmem:[#allocation2 + $0xa8] sm:$0x1] %vm728, 0
      %737 = vst.msk [vmem:[#allocation2 + $0xc0] sm:$0x1] %vm728, 0
      %738 = vst.msk [vmem:[#allocation2 + $0xd8] sm:$0x1] %vm728, 0
      %739 = vst.msk [vmem:[#allocation2 + $0xf0] sm:$0x1] %vm728, 0
      %740 = vst.msk [vmem:[#allocation2 + $0x108] sm:$0x1] %vm728, 0
      %741 = vst.msk [vmem:[#allocation2 + $0x120] sm:$0x1] %vm728, 0
      %742 = vst.msk [vmem:[#allocation2 + $0x138] sm:$0x1] %vm728, 0
      %743 = vst.msk [vmem:[#allocation2 + $0x150] sm:$0x1] %vm728, 0
      %744 = vst.msk [vmem:[#allocation2 + $0x168] sm:$0x1] %vm728, 0
      %745 = vst.msk [vmem:[#allocation2 + $0x180] sm:$0x1] %vm728, 0
      %746 = vst.msk [vmem:[#allocation2 + $0x198] sm:$0x1] %vm728, 0
      %747 = vst.msk [vmem:[#allocation2 + $0x11] sm:$0x1] %vm728, 0
      %748 = vst.msk [vmem:[#allocation2 + $0x29] sm:$0x1] %vm728, 0
      %749 = vst.msk [vmem:[#allocation2 + $0x41] sm:$0x1] %vm728, 0
      %750 = vst.msk [vmem:[#allocation2 + $0x59] sm:$0x1] %vm728, 0
      %751 = vst.msk [vmem:[#allocation2 + $0x71] sm:$0x1] %vm728, 0
      %752 = vst.msk [vmem:[#allocation2 + $0x89] sm:$0x1] %vm728, 0
      %753 = vst.msk [vmem:[#allocation2 + $0xa1] sm:$0x1] %vm728, 0
      %754 = vst.msk [vmem:[#allocation2 + $0xb9] sm:$0x1] %vm728, 0
      %755 = vst.msk [vmem:[#allocation2 + $0xd1] sm:$0x1] %vm728, 0
      %756 = vst.msk [vmem:[#allocation2 + $0xe9] sm:$0x1] %vm728, 0
      %757 = vst.msk [vmem:[#allocation2 + $0x101] sm:$0x1] %vm728, 0
      %758 = vst.msk [vmem:[#allocation2 + $0x119] sm:$0x1] %vm728, 0
      %759 = vst.msk [vmem:[#allocation2 + $0x131] sm:$0x1] %vm728, 0
      %760 = vst.msk [vmem:[#allocation2 + $0x149] sm:$0x1] %vm728, 0
      %761 = vst.msk [vmem:[#allocation2 + $0x161] sm:$0x1] %vm728, 0
      %762 = vst.msk [vmem:[#allocation2 + $0x179] sm:$0x1] %vm728, 0
      %763 = vst.msk [vmem:[#allocation2 + $0x191] sm:$0x1] %vm728, 0
      %764 = vst.msk [vmem:[#allocation2 + $0x1a9] sm:$0x1] %vm728, 0
      %s765 = scalar_lea.vmem [#allocation2], 24
      %766 = vst.msk [vmem:[%s765 + $0x1] sm:$0xff] %vm719, %v687
      %767 = vst.msk [vmem:[%s765 + $0x9] sm:$0xff] %vm719, %v688
      %768 = vst.msk [vmem:[%s765 + $0x19] sm:$0xff] %vm719, %v689
      %769 = vst.msk [vmem:[%s765 + $0x21] sm:$0xff] %vm719, %v690
      %770 = vst.msk [vmem:[%s765 + $0x31] sm:$0xff] %vm719, %v691
      %771 = vst.msk [vmem:[%s765 + $0x39] sm:$0xff] %vm719, %v692
      %772 = vst.msk [vmem:[%s765 + $0x49] sm:$0xff] %vm719, %v693
      %773 = vst.msk [vmem:[%s765 + $0x51] sm:$0xff] %vm719, %v694
      %774 = vst.msk [vmem:[%s765 + $0x61] sm:$0xff] %vm719, %v695
      %775 = vst.msk [vmem:[%s765 + $0x69] sm:$0xff] %vm719, %v696
      %776 = vst.msk [vmem:[%s765 + $0x79] sm:$0xff] %vm719, %v697
      %777 = vst.msk [vmem:[%s765 + $0x81] sm:$0xff] %vm719, %v698
      %778 = vst.msk [vmem:[%s765 + $0x91] sm:$0xff] %vm719, %v699
      %779 = vst.msk [vmem:[%s765 + $0x99] sm:$0xff] %vm719, %v700
      %780 = vst.msk [vmem:[%s765 + $0xa9] sm:$0xff] %vm719, %v701
      %781 = vst.msk [vmem:[%s765 + $0xb1] sm:$0xff] %vm719, %v702
      %782 = vst.msk [vmem:[%s765 + $0xc1] sm:$0xff] %vm719, %v703
      %783 = vst.msk [vmem:[%s765 + $0xc9] sm:$0xff] %vm719, %v704
      %784 = vst.msk [vmem:[%s765 + $0xd9] sm:$0xff] %vm719, %v705
      %785 = vst.msk [vmem:[%s765 + $0xe1] sm:$0xff] %vm719, %v706
      %786 = vst.msk [vmem:[%s765 + $0xf1] sm:$0xff] %vm719, %v707
      %787 = vst.msk [vmem:[%s765 + $0xf9] sm:$0xff] %vm719, %v708
      %788 = vst.msk [vmem:[%s765 + $0x109] sm:$0xff] %vm719, %v709
      %789 = vst.msk [vmem:[%s765 + $0x111] sm:$0xff] %vm719, %v710
      %790 = vst.msk [vmem:[%s765 + $0x121] sm:$0xff] %vm719, %v711
      %791 = vst.msk [vmem:[%s765 + $0x129] sm:$0xff] %vm719, %v712
      %792 = vst.msk [vmem:[%s765 + $0x139] sm:$0xff] %vm719, %v713
      %793 = vst.msk [vmem:[%s765 + $0x141] sm:$0xff] %vm719, %v714
      %794 = vst.msk [vmem:[%s765 + $0x151] sm:$0xff] %vm719, %v715
      %795 = vst.msk [vmem:[%s765 + $0x159] sm:$0xff] %vm719, %v716
      %796 = vst.msk [vmem:[%s765 + $0x169] sm:$0xff] %vm719, %v717
      %797 = vst.msk [vmem:[%s765 + $0x171] sm:$0xff] %vm719, %v718
      %v798 = vld [vmem:[#allocation2] sm:$0xff]
      %v799 = vld [vmem:[#allocation2 + $0x8] sm:$0xff]
      %v800 = vld [vmem:[#allocation2 + $0x10] sm:$0x3]
      %v801 = vld [vmem:[#allocation2 + $0x18] sm:$0xff]
      %v802 = vld [vmem:[#allocation2 + $0x20] sm:$0xff]
      %v803 = vld [vmem:[#allocation2 + $0x28] sm:$0x3]
      %v804 = vld [vmem:[#allocation2 + $0x30] sm:$0xff]
      %v805 = vld [vmem:[#allocation2 + $0x38] sm:$0xff]
      %v806 = vld [vmem:[#allocation2 + $0x40] sm:$0x3]
      %v807 = vld [vmem:[#allocation2 + $0x48] sm:$0xff]
      %v808 = vld [vmem:[#allocation2 + $0x50] sm:$0xff]
      %v809 = vld [vmem:[#allocation2 + $0x58] sm:$0x3]
      %v810 = vld [vmem:[#allocation2 + $0x60] sm:$0xff]
      %v811 = vld [vmem:[#allocation2 + $0x68] sm:$0xff]
      %v812 = vld [vmem:[#allocation2 + $0x70] sm:$0x3]
      %v813 = vld [vmem:[#allocation2 + $0x78] sm:$0xff]
      %v814 = vld [vmem:[#allocation2 + $0x80] sm:$0xff]
      %v815 = vld [vmem:[#allocation2 + $0x88] sm:$0x3]
      %v816 = vld [vmem:[#allocation2 + $0x90] sm:$0xff]
      %v817 = vld [vmem:[#allocation2 + $0x98] sm:$0xff]
      %v818 = vld [vmem:[#allocation2 + $0xa0] sm:$0x3]
      %v819 = vld [vmem:[#allocation2 + $0xa8] sm:$0xff]
      %v820 = vld [vmem:[#allocation2 + $0xb0] sm:$0xff]
      %v821 = vld [vmem:[#allocation2 + $0xb8] sm:$0x3]
      %v822 = vld [vmem:[#allocation2 + $0xc0] sm:$0xff]
      %v823 = vld [vmem:[#allocation2 + $0xc8] sm:$0xff]
      %v824 = vld [vmem:[#allocation2 + $0xd0] sm:$0x3]
      %v825 = vld [vmem:[#allocation2 + $0xd8] sm:$0xff]
      %v826 = vld [vmem:[#allocation2 + $0xe0] sm:$0xff]
      %v827 = vld [vmem:[#allocation2 + $0xe8] sm:$0x3]
      %v828 = vld [vmem:[#allocation2 + $0xf0] sm:$0xff]
      %v829 = vld [vmem:[#allocation2 + $0xf8] sm:$0xff]
      %v830 = vld [vmem:[#allocation2 + $0x100] sm:$0x3]
      %v831 = vld [vmem:[#allocation2 + $0x108] sm:$0xff]
      %v832 = vld [vmem:[#allocation2 + $0x110] sm:$0xff]
      %v833 = vld [vmem:[#allocation2 + $0x118] sm:$0x3]
      %v834 = vld [vmem:[#allocation2 + $0x120] sm:$0xff]
      %v835 = vld [vmem:[#allocation2 + $0x128] sm:$0xff]
      %v836 = vld [vmem:[#allocation2 + $0x130] sm:$0x3]
      %v837 = vld [vmem:[#allocation2 + $0x138] sm:$0xff]
      %v838 = vld [vmem:[#allocation2 + $0x140] sm:$0xff]
      %v839 = vld [vmem:[#allocation2 + $0x148] sm:$0x3]
      %v840 = vld [vmem:[#allocation2 + $0x150] sm:$0xff]
      %v841 = vld [vmem:[#allocation2 + $0x158] sm:$0xff]
      %v842 = vld [vmem:[#allocation2 + $0x160] sm:$0x3]
      %v843 = vld [vmem:[#allocation2 + $0x168] sm:$0xff]
      %v844 = vld [vmem:[#allocation2 + $0x170] sm:$0xff]
      %v845 = vld [vmem:[#allocation2 + $0x178] sm:$0x3]
      %v846 = vld [vmem:[%s765] sm:$0xff]
      %v847 = vld [vmem:[%s765 + $0x8] sm:$0xff]
      %v848 = vld [vmem:[%s765 + $0x10] sm:$0x3]
      %v849 = vld [vmem:[%s765 + $0x18] sm:$0xff]
      %v850 = vld [vmem:[%s765 + $0x20] sm:$0xff]
      %v851 = vld [vmem:[%s765 + $0x28] sm:$0x3]
      %v852 = vld [vmem:[%s765 + $0x30] sm:$0xff]
      %v853 = vld [vmem:[%s765 + $0x38] sm:$0xff]
      %v854 = vld [vmem:[%s765 + $0x40] sm:$0x3]
      %v855 = vld [vmem:[%s765 + $0x48] sm:$0xff]
      %v856 = vld [vmem:[%s765 + $0x50] sm:$0xff]
      %v857 = vld [vmem:[%s765 + $0x58] sm:$0x3]
      %v858 = vld [vmem:[%s765 + $0x60] sm:$0xff]
      %v859 = vld [vmem:[%s765 + $0x68] sm:$0xff]
      %v860 = vld [vmem:[%s765 + $0x70] sm:$0x3]
      %v861 = vld [vmem:[%s765 + $0x78] sm:$0xff]
      %v862 = vld [vmem:[%s765 + $0x80] sm:$0xff]
      %v863 = vld [vmem:[%s765 + $0x88] sm:$0x3]
      %v864 = vld [vmem:[%s765 + $0x90] sm:$0xff]
      %v865 = vld [vmem:[%s765 + $0x98] sm:$0xff]
      %v866 = vld [vmem:[%s765 + $0xa0] sm:$0x3]
      %v867 = vld [vmem:[%s765 + $0xa8] sm:$0xff]
      %v868 = vld [vmem:[%s765 + $0xb0] sm:$0xff]
      %v869 = vld [vmem:[%s765 + $0xb8] sm:$0x3]
      %v870 = vld [vmem:[%s765 + $0xc0] sm:$0xff]
      %v871 = vld [vmem:[%s765 + $0xc8] sm:$0xff]
      %v872 = vld [vmem:[%s765 + $0xd0] sm:$0x3]
      %v873 = vld [vmem:[%s765 + $0xd8] sm:$0xff]
      %v874 = vld [vmem:[%s765 + $0xe0] sm:$0xff]
      %v875 = vld [vmem:[%s765 + $0xe8] sm:$0x3]
      %v876 = vld [vmem:[%s765 + $0xf0] sm:$0xff]
      %v877 = vld [vmem:[%s765 + $0xf8] sm:$0xff]
      %v878 = vld [vmem:[%s765 + $0x100] sm:$0x3]
      %v879 = vld [vmem:[%s765 + $0x108] sm:$0xff]
      %v880 = vld [vmem:[%s765 + $0x110] sm:$0xff]
      %v881 = vld [vmem:[%s765 + $0x118] sm:$0x3]
      %v882 = vld [vmem:[%s765 + $0x120] sm:$0xff]
      %v883 = vld [vmem:[%s765 + $0x128] sm:$0xff]
      %v884 = vld [vmem:[%s765 + $0x130] sm:$0x3]
      %v885 = vld [vmem:[%s765 + $0x138] sm:$0xff]
      %v886 = vld [vmem:[%s765 + $0x140] sm:$0xff]
      %v887 = vld [vmem:[%s765 + $0x148] sm:$0x3]
      %v888 = vld [vmem:[%s765 + $0x150] sm:$0xff]
      %v889 = vld [vmem:[%s765 + $0x158] sm:$0xff]
      %v890 = vld [vmem:[%s765 + $0x160] sm:$0x3]
      %v891 = vld [vmem:[%s765 + $0x168] sm:$0xff]
      %v892 = vld [vmem:[%s765 + $0x170] sm:$0xff]
      %v893 = vld [vmem:[%s765 + $0x178] sm:$0x3]
      %vm894 = vcmp.gt.s32.totalorder %v798, %v846
      %v895 = vsel %vm894, %v798, %v846
      %vm896 = vcmp.gt.s32.totalorder %v799, %v847
      %v897 = vsel %vm896, %v799, %v847
      %vm898 = vcmp.gt.s32.totalorder %v800, %v848
      %v899 = vsel %vm898, %v800, %v848
      %vm900 = vcmp.gt.s32.totalorder %v801, %v849
      %v901 = vsel %vm900, %v801, %v849
      %vm902 = vcmp.gt.s32.totalorder %v802, %v850
      %v903 = vsel %vm902, %v802, %v850
      %vm904 = vcmp.gt.s32.totalorder %v803, %v851
      %v905 = vsel %vm904, %v803, %v851
      %vm906 = vcmp.gt.s32.totalorder %v804, %v852
      %v907 = vsel %vm906, %v804, %v852
      %vm908 = vcmp.gt.s32.totalorder %v805, %v853
      %v909 = vsel %vm908, %v805, %v853
      %vm910 = vcmp.gt.s32.totalorder %v806, %v854
      %v911 = vsel %vm910, %v806, %v854
      %vm912 = vcmp.gt.s32.totalorder %v807, %v855
      %v913 = vsel %vm912, %v807, %v855
      %vm914 = vcmp.gt.s32.totalorder %v808, %v856
      %v915 = vsel %vm914, %v808, %v856
      %vm916 = vcmp.gt.s32.totalorder %v809, %v857
      %v917 = vsel %vm916, %v809, %v857
      %vm918 = vcmp.gt.s32.totalorder %v810, %v858
      %v919 = vsel %vm918, %v810, %v858
      %vm920 = vcmp.gt.s32.totalorder %v811, %v859
      %v921 = vsel %vm920, %v811, %v859
      %vm922 = vcmp.gt.s32.totalorder %v812, %v860
      %v923 = vsel %vm922, %v812, %v860
      %vm924 = vcmp.gt.s32.totalorder %v813, %v861
      %v925 = vsel %vm924, %v813, %v861
      %vm926 = vcmp.gt.s32.totalorder %v814, %v862
      %v927 = vsel %vm926, %v814, %v862
      %vm928 = vcmp.gt.s32.totalorder %v815, %v863
      %v929 = vsel %vm928, %v815, %v863
      %vm930 = vcmp.gt.s32.totalorder %v816, %v864
      %v931 = vsel %vm930, %v816, %v864
      %vm932 = vcmp.gt.s32.totalorder %v817, %v865
      %v933 = vsel %vm932, %v817, %v865
      %vm934 = vcmp.gt.s32.totalorder %v818, %v866
      %v935 = vsel %vm934, %v818, %v866
      %vm936 = vcmp.gt.s32.totalorder %v819, %v867
      %v937 = vsel %vm936, %v819, %v867
      %vm938 = vcmp.gt.s32.totalorder %v820, %v868
      %v939 = vsel %vm938, %v820, %v868
      %vm940 = vcmp.gt.s32.totalorder %v821, %v869
      %v941 = vsel %vm940, %v821, %v869
      %vm942 = vcmp.gt.s32.totalorder %v822, %v870
      %v943 = vsel %vm942, %v822, %v870
      %vm944 = vcmp.gt.s32.totalorder %v823, %v871
      %v945 = vsel %vm944, %v823, %v871
      %vm946 = vcmp.gt.s32.totalorder %v824, %v872
      %v947 = vsel %vm946, %v824, %v872
      %vm948 = vcmp.gt.s32.totalorder %v825, %v873
      %v949 = vsel %vm948, %v825, %v873
      %vm950 = vcmp.gt.s32.totalorder %v826, %v874
      %v951 = vsel %vm950, %v826, %v874
      %vm952 = vcmp.gt.s32.totalorder %v827, %v875
      %v953 = vsel %vm952, %v827, %v875
      %vm954 = vcmp.gt.s32.totalorder %v828, %v876
      %v955 = vsel %vm954, %v828, %v876
      %vm956 = vcmp.gt.s32.totalorder %v829, %v877
      %v957 = vsel %vm956, %v829, %v877
      %vm958 = vcmp.gt.s32.totalorder %v830, %v878
      %v959 = vsel %vm958, %v830, %v878
      %vm960 = vcmp.gt.s32.totalorder %v831, %v879
      %v961 = vsel %vm960, %v831, %v879
      %vm962 = vcmp.gt.s32.totalorder %v832, %v880
      %v963 = vsel %vm962, %v832, %v880
      %vm964 = vcmp.gt.s32.totalorder %v833, %v881
      %v965 = vsel %vm964, %v833, %v881
      %vm966 = vcmp.gt.s32.totalorder %v834, %v882
      %v967 = vsel %vm966, %v834, %v882
      %vm968 = vcmp.gt.s32.totalorder %v835, %v883
      %v969 = vsel %vm968, %v835, %v883
      %vm970 = vcmp.gt.s32.totalorder %v836, %v884
      %v971 = vsel %vm970, %v836, %v884
      %vm972 = vcmp.gt.s32.totalorder %v837, %v885
      %v973 = vsel %vm972, %v837, %v885
      %vm974 = vcmp.gt.s32.totalorder %v838, %v886
      %v975 = vsel %vm974, %v838, %v886
      %vm976 = vcmp.gt.s32.totalorder %v839, %v887
      %v977 = vsel %vm976, %v839, %v887
      %vm978 = vcmp.gt.s32.totalorder %v840, %v888
      %v979 = vsel %vm978, %v840, %v888
      %vm980 = vcmp.gt.s32.totalorder %v841, %v889
      %v981 = vsel %vm980, %v841, %v889
      %vm982 = vcmp.gt.s32.totalorder %v842, %v890
      %v983 = vsel %vm982, %v842, %v890
      %vm984 = vcmp.gt.s32.totalorder %v843, %v891
      %v985 = vsel %vm984, %v843, %v891
      %vm986 = vcmp.gt.s32.totalorder %v844, %v892
      %v987 = vsel %vm986, %v844, %v892
      %vm988 = vcmp.gt.s32.totalorder %v845, %v893
      %v989 = vsel %vm988, %v845, %v893
      %s990 = scalar_lea.vmem [#allocation2], 48
      %v991 = vld [vmem:[%s990] sm:$0xff]
      %v992 = vld [vmem:[%s990 + $0x8] sm:$0xff]
      %v993 = vld [vmem:[%s990 + $0x10] sm:$0x3]
      %v994 = vld [vmem:[%s990 + $0x18] sm:$0xff]
      %v995 = vld [vmem:[%s990 + $0x20] sm:$0xff]
      %v996 = vld [vmem:[%s990 + $0x28] sm:$0x3]
      %v997 = vld [vmem:[%s990 + $0x30] sm:$0xff]
      %v998 = vld [vmem:[%s990 + $0x38] sm:$0xff]
      %v999 = vld [vmem:[%s990 + $0x40] sm:$0x3]
      %v1000 = vld [vmem:[%s990 + $0x48] sm:$0xff]
      %v1001 = vld [vmem:[%s990 + $0x50] sm:$0xff]
      %v1002 = vld [vmem:[%s990 + $0x58] sm:$0x3]
      %v1003 = vld [vmem:[%s990 + $0x60] sm:$0xff]
      %v1004 = vld [vmem:[%s990 + $0x68] sm:$0xff]
      %v1005 = vld [vmem:[%s990 + $0x70] sm:$0x3]
      %v1006 = vld [vmem:[%s990 + $0x78] sm:$0xff]
      %v1007 = vld [vmem:[%s990 + $0x80] sm:$0xff]
      %v1008 = vld [vmem:[%s990 + $0x88] sm:$0x3]
      %v1009 = vld [vmem:[%s990 + $0x90] sm:$0xff]
      %v1010 = vld [vmem:[%s990 + $0x98] sm:$0xff]
      %v1011 = vld [vmem:[%s990 + $0xa0] sm:$0x3]
      %v1012 = vld [vmem:[%s990 + $0xa8] sm:$0xff]
      %v1013 = vld [vmem:[%s990 + $0xb0] sm:$0xff]
      %v1014 = vld [vmem:[%s990 + $0xb8] sm:$0x3]
      %v1015 = vld [vmem:[%s990 + $0xc0] sm:$0xff]
      %v1016 = vld [vmem:[%s990 + $0xc8] sm:$0xff]
      %v1017 = vld [vmem:[%s990 + $0xd0] sm:$0x3]
      %v1018 = vld [vmem:[%s990 + $0xd8] sm:$0xff]
      %v1019 = vld [vmem:[%s990 + $0xe0] sm:$0xff]
      %v1020 = vld [vmem:[%s990 + $0xe8] sm:$0x3]
      %v1021 = vld [vmem:[%s990 + $0xf0] sm:$0xff]
      %v1022 = vld [vmem:[%s990 + $0xf8] sm:$0xff]
      %v1023 = vld [vmem:[%s990 + $0x100] sm:$0x3]
      %v1024 = vld [vmem:[%s990 + $0x108] sm:$0xff]
      %v1025 = vld [vmem:[%s990 + $0x110] sm:$0xff]
      %v1026 = vld [vmem:[%s990 + $0x118] sm:$0x3]
      %v1027 = vld [vmem:[%s990 + $0x120] sm:$0xff]
      %v1028 = vld [vmem:[%s990 + $0x128] sm:$0xff]
      %v1029 = vld [vmem:[%s990 + $0x130] sm:$0x3]
      %v1030 = vld [vmem:[%s990 + $0x138] sm:$0xff]
      %v1031 = vld [vmem:[%s990 + $0x140] sm:$0xff]
      %v1032 = vld [vmem:[%s990 + $0x148] sm:$0x3]
      %v1033 = vld [vmem:[%s990 + $0x150] sm:$0xff]
      %v1034 = vld [vmem:[%s990 + $0x158] sm:$0xff]
      %v1035 = vld [vmem:[%s990 + $0x160] sm:$0x3]
      %v1036 = vld [vmem:[%s990 + $0x168] sm:$0xff]
      %v1037 = vld [vmem:[%s990 + $0x170] sm:$0xff]
      %v1038 = vld [vmem:[%s990 + $0x178] sm:$0x3]
      %vm1039 = vcmp.gt.s32.totalorder %v895, %v991
      %v1040 = vsel %vm1039, %v895, %v991
      %vm1041 = vcmp.gt.s32.totalorder %v897, %v992
      %v1042 = vsel %vm1041, %v897, %v992
      %vm1043 = vcmp.gt.s32.totalorder %v899, %v993
      %v1044 = vsel %vm1043, %v899, %v993
      %vm1045 = vcmp.gt.s32.totalorder %v901, %v994
      %v1046 = vsel %vm1045, %v901, %v994
      %vm1047 = vcmp.gt.s32.totalorder %v903, %v995
      %v1048 = vsel %vm1047, %v903, %v995
      %vm1049 = vcmp.gt.s32.totalorder %v905, %v996
      %v1050 = vsel %vm1049, %v905, %v996
      %vm1051 = vcmp.gt.s32.totalorder %v907, %v997
      %v1052 = vsel %vm1051, %v907, %v997
      %vm1053 = vcmp.gt.s32.totalorder %v909, %v998
      %v1054 = vsel %vm1053, %v909, %v998
      %vm1055 = vcmp.gt.s32.totalorder %v911, %v999
      %v1056 = vsel %vm1055, %v911, %v999
      %vm1057 = vcmp.gt.s32.totalorder %v913, %v1000
      %v1058 = vsel %vm1057, %v913, %v1000
      %vm1059 = vcmp.gt.s32.totalorder %v915, %v1001
      %v1060 = vsel %vm1059, %v915, %v1001
      %vm1061 = vcmp.gt.s32.totalorder %v917, %v1002
      %v1062 = vsel %vm1061, %v917, %v1002
      %vm1063 = vcmp.gt.s32.totalorder %v919, %v1003
      %v1064 = vsel %vm1063, %v919, %v1003
      %vm1065 = vcmp.gt.s32.totalorder %v921, %v1004
      %v1066 = vsel %vm1065, %v921, %v1004
      %vm1067 = vcmp.gt.s32.totalorder %v923, %v1005
      %v1068 = vsel %vm1067, %v923, %v1005
      %vm1069 = vcmp.gt.s32.totalorder %v925, %v1006
      %v1070 = vsel %vm1069, %v925, %v1006
      %vm1071 = vcmp.gt.s32.totalorder %v927, %v1007
      %v1072 = vsel %vm1071, %v927, %v1007
      %vm1073 = vcmp.gt.s32.totalorder %v929, %v1008
      %v1074 = vsel %vm1073, %v929, %v1008
      %vm1075 = vcmp.gt.s32.totalorder %v931, %v1009
      %v1076 = vsel %vm1075, %v931, %v1009
      %vm1077 = vcmp.gt.s32.totalorder %v933, %v1010
      %v1078 = vsel %vm1077, %v933, %v1010
      %vm1079 = vcmp.gt.s32.totalorder %v935, %v1011
      %v1080 = vsel %vm1079, %v935, %v1011
      %vm1081 = vcmp.gt.s32.totalorder %v937, %v1012
      %v1082 = vsel %vm1081, %v937, %v1012
      %vm1083 = vcmp.gt.s32.totalorder %v939, %v1013
      %v1084 = vsel %vm1083, %v939, %v1013
      %vm1085 = vcmp.gt.s32.totalorder %v941, %v1014
      %v1086 = vsel %vm1085, %v941, %v1014
      %vm1087 = vcmp.gt.s32.totalorder %v943, %v1015
      %v1088 = vsel %vm1087, %v943, %v1015
      %vm1089 = vcmp.gt.s32.totalorder %v945, %v1016
      %v1090 = vsel %vm1089, %v945, %v1016
      %vm1091 = vcmp.gt.s32.totalorder %v947, %v1017
      %v1092 = vsel %vm1091, %v947, %v1017
      %vm1093 = vcmp.gt.s32.totalorder %v949, %v1018
      %v1094 = vsel %vm1093, %v949, %v1018
      %vm1095 = vcmp.gt.s32.totalorder %v951, %v1019
      %v1096 = vsel %vm1095, %v951, %v1019
      %vm1097 = vcmp.gt.s32.totalorder %v953, %v1020
      %v1098 = vsel %vm1097, %v953, %v1020
      %vm1099 = vcmp.gt.s32.totalorder %v955, %v1021
      %v1100 = vsel %vm1099, %v955, %v1021
      %vm1101 = vcmp.gt.s32.totalorder %v957, %v1022
      %v1102 = vsel %vm1101, %v957, %v1022
      %vm1103 = vcmp.gt.s32.totalorder %v959, %v1023
      %v1104 = vsel %vm1103, %v959, %v1023
      %vm1105 = vcmp.gt.s32.totalorder %v961, %v1024
      %v1106 = vsel %vm1105, %v961, %v1024
      %vm1107 = vcmp.gt.s32.totalorder %v963, %v1025
      %v1108 = vsel %vm1107, %v963, %v1025
      %vm1109 = vcmp.gt.s32.totalorder %v965, %v1026
      %v1110 = vsel %vm1109, %v965, %v1026
      %vm1111 = vcmp.gt.s32.totalorder %v967, %v1027
      %v1112 = vsel %vm1111, %v967, %v1027
      %vm1113 = vcmp.gt.s32.totalorder %v969, %v1028
      %v1114 = vsel %vm1113, %v969, %v1028
      %vm1115 = vcmp.gt.s32.totalorder %v971, %v1029
      %v1116 = vsel %vm1115, %v971, %v1029
      %vm1117 = vcmp.gt.s32.totalorder %v973, %v1030
      %v1118 = vsel %vm1117, %v973, %v1030
      %vm1119 = vcmp.gt.s32.totalorder %v975, %v1031
      %v1120 = vsel %vm1119, %v975, %v1031
      %vm1121 = vcmp.gt.s32.totalorder %v977, %v1032
      %v1122 = vsel %vm1121, %v977, %v1032
      %vm1123 = vcmp.gt.s32.totalorder %v979, %v1033
      %v1124 = vsel %vm1123, %v979, %v1033
      %vm1125 = vcmp.gt.s32.totalorder %v981, %v1034
      %v1126 = vsel %vm1125, %v981, %v1034
      %vm1127 = vcmp.gt.s32.totalorder %v983, %v1035
      %v1128 = vsel %vm1127, %v983, %v1035
      %vm1129 = vcmp.gt.s32.totalorder %v985, %v1036
      %v1130 = vsel %vm1129, %v985, %v1036
      %vm1131 = vcmp.gt.s32.totalorder %v987, %v1037
      %v1132 = vsel %vm1131, %v987, %v1037
      %vm1133 = vcmp.gt.s32.totalorder %v989, %v1038
      %v1134 = vsel %vm1133, %v989, %v1038
      %vm1135 = vcmask 1046528
      %v1136 = vrot.slane %v1040, 1
      %v1137 = vrot.slane %v1042, 1
      %v1138 = vsel %vm1135, %v1136, %v1137
      %v1139 = vrot.slane %v1044, 1
      %v1140 = vsel %vm1135, %v1137, %v1139
      %v1141 = vrot.slane %v1046, 1
      %v1142 = vrot.slane %v1048, 1
      %v1143 = vsel %vm1135, %v1141, %v1142
      %v1144 = vrot.slane %v1050, 1
      %v1145 = vsel %vm1135, %v1142, %v1144
      %v1146 = vrot.slane %v1052, 1
      %v1147 = vrot.slane %v1054, 1
      %v1148 = vsel %vm1135, %v1146, %v1147
      %v1149 = vrot.slane %v1056, 1
      %v1150 = vsel %vm1135, %v1147, %v1149
      %v1151 = vrot.slane %v1058, 1
      %v1152 = vrot.slane %v1060, 1
      %v1153 = vsel %vm1135, %v1151, %v1152
      %v1154 = vrot.slane %v1062, 1
      %v1155 = vsel %vm1135, %v1152, %v1154
      %v1156 = vrot.slane %v1064, 1
      %v1157 = vrot.slane %v1066, 1
      %v1158 = vsel %vm1135, %v1156, %v1157
      %v1159 = vrot.slane %v1068, 1
      %v1160 = vsel %vm1135, %v1157, %v1159
      %v1161 = vrot.slane %v1070, 1
      %v1162 = vrot.slane %v1072, 1
      %v1163 = vsel %vm1135, %v1161, %v1162
      %v1164 = vrot.slane %v1074, 1
      %v1165 = vsel %vm1135, %v1162, %v1164
      %v1166 = vrot.slane %v1076, 1
      %v1167 = vrot.slane %v1078, 1
      %v1168 = vsel %vm1135, %v1166, %v1167
      %v1169 = vrot.slane %v1080, 1
      %v1170 = vsel %vm1135, %v1167, %v1169
      %v1171 = vrot.slane %v1082, 1
      %v1172 = vrot.slane %v1084, 1
      %v1173 = vsel %vm1135, %v1171, %v1172
      %v1174 = vrot.slane %v1086, 1
      %v1175 = vsel %vm1135, %v1172, %v1174
      %v1176 = vrot.slane %v1088, 1
      %v1177 = vrot.slane %v1090, 1
      %v1178 = vsel %vm1135, %v1176, %v1177
      %v1179 = vrot.slane %v1092, 1
      %v1180 = vsel %vm1135, %v1177, %v1179
      %v1181 = vrot.slane %v1094, 1
      %v1182 = vrot.slane %v1096, 1
      %v1183 = vsel %vm1135, %v1181, %v1182
      %v1184 = vrot.slane %v1098, 1
      %v1185 = vsel %vm1135, %v1182, %v1184
      %v1186 = vrot.slane %v1100, 1
      %v1187 = vrot.slane %v1102, 1
      %v1188 = vsel %vm1135, %v1186, %v1187
      %v1189 = vrot.slane %v1104, 1
      %v1190 = vsel %vm1135, %v1187, %v1189
      %v1191 = vrot.slane %v1106, 1
      %v1192 = vrot.slane %v1108, 1
      %v1193 = vsel %vm1135, %v1191, %v1192
      %v1194 = vrot.slane %v1110, 1
      %v1195 = vsel %vm1135, %v1192, %v1194
      %v1196 = vrot.slane %v1112, 1
      %v1197 = vrot.slane %v1114, 1
      %v1198 = vsel %vm1135, %v1196, %v1197
      %v1199 = vrot.slane %v1116, 1
      %v1200 = vsel %vm1135, %v1197, %v1199
      %v1201 = vrot.slane %v1118, 1
      %v1202 = vrot.slane %v1120, 1
      %v1203 = vsel %vm1135, %v1201, %v1202
      %v1204 = vrot.slane %v1122, 1
      %v1205 = vsel %vm1135, %v1202, %v1204
      %v1206 = vrot.slane %v1124, 1
      %v1207 = vrot.slane %v1126, 1
      %v1208 = vsel %vm1135, %v1206, %v1207
      %v1209 = vrot.slane %v1128, 1
      %v1210 = vsel %vm1135, %v1207, %v1209
      %v1211 = vrot.slane %v1130, 1
      %v1212 = vrot.slane %v1132, 1
      %v1213 = vsel %vm1135, %v1211, %v1212
      %v1214 = vrot.slane %v1134, 1
      %v1215 = vsel %vm1135, %v1212, %v1214
      %vm1216 = vcmp.gt.s32.totalorder %v1040, %v1138
      %v1217 = vsel %vm1216, %v1040, %v1138
      %vm1218 = vcmp.gt.s32.totalorder %v1042, %v1140
      %v1219 = vsel %vm1218, %v1042, %v1140
      %vm1220 = vcmp.gt.s32.totalorder %v1046, %v1143
      %v1221 = vsel %vm1220, %v1046, %v1143
      %vm1222 = vcmp.gt.s32.totalorder %v1048, %v1145
      %v1223 = vsel %vm1222, %v1048, %v1145
      %vm1224 = vcmp.gt.s32.totalorder %v1052, %v1148
      %v1225 = vsel %vm1224, %v1052, %v1148
      %vm1226 = vcmp.gt.s32.totalorder %v1054, %v1150
      %v1227 = vsel %vm1226, %v1054, %v1150
      %vm1228 = vcmp.gt.s32.totalorder %v1058, %v1153
      %v1229 = vsel %vm1228, %v1058, %v1153
      %vm1230 = vcmp.gt.s32.totalorder %v1060, %v1155
      %v1231 = vsel %vm1230, %v1060, %v1155
      %vm1232 = vcmp.gt.s32.totalorder %v1064, %v1158
      %v1233 = vsel %vm1232, %v1064, %v1158
      %vm1234 = vcmp.gt.s32.totalorder %v1066, %v1160
      %v1235 = vsel %vm1234, %v1066, %v1160
      %vm1236 = vcmp.gt.s32.totalorder %v1070, %v1163
      %v1237 = vsel %vm1236, %v1070, %v1163
      %vm1238 = vcmp.gt.s32.totalorder %v1072, %v1165
      %v1239 = vsel %vm1238, %v1072, %v1165
      %vm1240 = vcmp.gt.s32.totalorder %v1076, %v1168
      %v1241 = vsel %vm1240, %v1076, %v1168
      %vm1242 = vcmp.gt.s32.totalorder %v1078, %v1170
      %v1243 = vsel %vm1242, %v1078, %v1170
      %vm1244 = vcmp.gt.s32.totalorder %v1082, %v1173
      %v1245 = vsel %vm1244, %v1082, %v1173
      %vm1246 = vcmp.gt.s32.totalorder %v1084, %v1175
      %v1247 = vsel %vm1246, %v1084, %v1175
      %vm1248 = vcmp.gt.s32.totalorder %v1088, %v1178
      %v1249 = vsel %vm1248, %v1088, %v1178
      %vm1250 = vcmp.gt.s32.totalorder %v1090, %v1180
      %v1251 = vsel %vm1250, %v1090, %v1180
      %vm1252 = vcmp.gt.s32.totalorder %v1094, %v1183
      %v1253 = vsel %vm1252, %v1094, %v1183
      %vm1254 = vcmp.gt.s32.totalorder %v1096, %v1185
      %v1255 = vsel %vm1254, %v1096, %v1185
      %vm1256 = vcmp.gt.s32.totalorder %v1100, %v1188
      %v1257 = vsel %vm1256, %v1100, %v1188
      %vm1258 = vcmp.gt.s32.totalorder %v1102, %v1190
      %v1259 = vsel %vm1258, %v1102, %v1190
      %vm1260 = vcmp.gt.s32.totalorder %v1106, %v1193
      %v1261 = vsel %vm1260, %v1106, %v1193
      %vm1262 = vcmp.gt.s32.totalorder %v1108, %v1195
      %v1263 = vsel %vm1262, %v1108, %v1195
      %vm1264 = vcmp.gt.s32.totalorder %v1112, %v1198
      %v1265 = vsel %vm1264, %v1112, %v1198
      %vm1266 = vcmp.gt.s32.totalorder %v1114, %v1200
      %v1267 = vsel %vm1266, %v1114, %v1200
      %vm1268 = vcmp.gt.s32.totalorder %v1118, %v1203
      %v1269 = vsel %vm1268, %v1118, %v1203
      %vm1270 = vcmp.gt.s32.totalorder %v1120, %v1205
      %v1271 = vsel %vm1270, %v1120, %v1205
      %vm1272 = vcmp.gt.s32.totalorder %v1124, %v1208
      %v1273 = vsel %vm1272, %v1124, %v1208
      %vm1274 = vcmp.gt.s32.totalorder %v1126, %v1210
      %v1275 = vsel %vm1274, %v1126, %v1210
      %vm1276 = vcmp.gt.s32.totalorder %v1130, %v1213
      %v1277 = vsel %vm1276, %v1130, %v1213
      %vm1278 = vcmp.gt.s32.totalorder %v1132, %v1215
      %v1279 = vsel %vm1278, %v1132, %v1215
      %vm1280 = vcmask 1045504
      %v1281 = vrot.slane %v1040, 2
      %v1282 = vrot.slane %v1042, 2
      %v1283 = vsel %vm1280, %v1281, %v1282
      %v1284 = vrot.slane %v1044, 2
      %v1285 = vsel %vm1280, %v1282, %v1284
      %v1286 = vrot.slane %v1046, 2
      %v1287 = vrot.slane %v1048, 2
      %v1288 = vsel %vm1280, %v1286, %v1287
      %v1289 = vrot.slane %v1050, 2
      %v1290 = vsel %vm1280, %v1287, %v1289
      %v1291 = vrot.slane %v1052, 2
      %v1292 = vrot.slane %v1054, 2
      %v1293 = vsel %vm1280, %v1291, %v1292
      %v1294 = vrot.slane %v1056, 2
      %v1295 = vsel %vm1280, %v1292, %v1294
      %v1296 = vrot.slane %v1058, 2
      %v1297 = vrot.slane %v1060, 2
      %v1298 = vsel %vm1280, %v1296, %v1297
      %v1299 = vrot.slane %v1062, 2
      %v1300 = vsel %vm1280, %v1297, %v1299
      %v1301 = vrot.slane %v1064, 2
      %v1302 = vrot.slane %v1066, 2
      %v1303 = vsel %vm1280, %v1301, %v1302
      %v1304 = vrot.slane %v1068, 2
      %v1305 = vsel %vm1280, %v1302, %v1304
      %v1306 = vrot.slane %v1070, 2
      %v1307 = vrot.slane %v1072, 2
      %v1308 = vsel %vm1280, %v1306, %v1307
      %v1309 = vrot.slane %v1074, 2
      %v1310 = vsel %vm1280, %v1307, %v1309
      %v1311 = vrot.slane %v1076, 2
      %v1312 = vrot.slane %v1078, 2
      %v1313 = vsel %vm1280, %v1311, %v1312
      %v1314 = vrot.slane %v1080, 2
      %v1315 = vsel %vm1280, %v1312, %v1314
      %v1316 = vrot.slane %v1082, 2
      %v1317 = vrot.slane %v1084, 2
      %v1318 = vsel %vm1280, %v1316, %v1317
      %v1319 = vrot.slane %v1086, 2
      %v1320 = vsel %vm1280, %v1317, %v1319
      %v1321 = vrot.slane %v1088, 2
      %v1322 = vrot.slane %v1090, 2
      %v1323 = vsel %vm1280, %v1321, %v1322
      %v1324 = vrot.slane %v1092, 2
      %v1325 = vsel %vm1280, %v1322, %v1324
      %v1326 = vrot.slane %v1094, 2
      %v1327 = vrot.slane %v1096, 2
      %v1328 = vsel %vm1280, %v1326, %v1327
      %v1329 = vrot.slane %v1098, 2
      %v1330 = vsel %vm1280, %v1327, %v1329
      %v1331 = vrot.slane %v1100, 2
      %v1332 = vrot.slane %v1102, 2
      %v1333 = vsel %vm1280, %v1331, %v1332
      %v1334 = vrot.slane %v1104, 2
      %v1335 = vsel %vm1280, %v1332, %v1334
      %v1336 = vrot.slane %v1106, 2
      %v1337 = vrot.slane %v1108, 2
      %v1338 = vsel %vm1280, %v1336, %v1337
      %v1339 = vrot.slane %v1110, 2
      %v1340 = vsel %vm1280, %v1337, %v1339
      %v1341 = vrot.slane %v1112, 2
      %v1342 = vrot.slane %v1114, 2
      %v1343 = vsel %vm1280, %v1341, %v1342
      %v1344 = vrot.slane %v1116, 2
      %v1345 = vsel %vm1280, %v1342, %v1344
      %v1346 = vrot.slane %v1118, 2
      %v1347 = vrot.slane %v1120, 2
      %v1348 = vsel %vm1280, %v1346, %v1347
      %v1349 = vrot.slane %v1122, 2
      %v1350 = vsel %vm1280, %v1347, %v1349
      %v1351 = vrot.slane %v1124, 2
      %v1352 = vrot.slane %v1126, 2
      %v1353 = vsel %vm1280, %v1351, %v1352
      %v1354 = vrot.slane %v1128, 2
      %v1355 = vsel %vm1280, %v1352, %v1354
      %v1356 = vrot.slane %v1130, 2
      %v1357 = vrot.slane %v1132, 2
      %v1358 = vsel %vm1280, %v1356, %v1357
      %v1359 = vrot.slane %v1134, 2
      %v1360 = vsel %vm1280, %v1357, %v1359
      %vm1361 = vcmp.gt.s32.totalorder %v1217, %v1283
      %v1362 = vsel %vm1361, %v1217, %v1283
      %vm1363 = vcmp.gt.s32.totalorder %v1219, %v1285
      %v1364 = vsel %vm1363, %v1219, %v1285
      %vm1365 = vcmp.gt.s32.totalorder %v1221, %v1288
      %v1366 = vsel %vm1365, %v1221, %v1288
      %vm1367 = vcmp.gt.s32.totalorder %v1223, %v1290
      %v1368 = vsel %vm1367, %v1223, %v1290
      %vm1369 = vcmp.gt.s32.totalorder %v1225, %v1293
      %v1370 = vsel %vm1369, %v1225, %v1293
      %vm1371 = vcmp.gt.s32.totalorder %v1227, %v1295
      %v1372 = vsel %vm1371, %v1227, %v1295
      %vm1373 = vcmp.gt.s32.totalorder %v1229, %v1298
      %v1374 = vsel %vm1373, %v1229, %v1298
      %vm1375 = vcmp.gt.s32.totalorder %v1231, %v1300
      %v1376 = vsel %vm1375, %v1231, %v1300
      %vm1377 = vcmp.gt.s32.totalorder %v1233, %v1303
      %v1378 = vsel %vm1377, %v1233, %v1303
      %vm1379 = vcmp.gt.s32.totalorder %v1235, %v1305
      %v1380 = vsel %vm1379, %v1235, %v1305
      %vm1381 = vcmp.gt.s32.totalorder %v1237, %v1308
      %v1382 = vsel %vm1381, %v1237, %v1308
      %vm1383 = vcmp.gt.s32.totalorder %v1239, %v1310
      %v1384 = vsel %vm1383, %v1239, %v1310
      %vm1385 = vcmp.gt.s32.totalorder %v1241, %v1313
      %v1386 = vsel %vm1385, %v1241, %v1313
      %vm1387 = vcmp.gt.s32.totalorder %v1243, %v1315
      %v1388 = vsel %vm1387, %v1243, %v1315
      %vm1389 = vcmp.gt.s32.totalorder %v1245, %v1318
      %v1390 = vsel %vm1389, %v1245, %v1318
      %vm1391 = vcmp.gt.s32.totalorder %v1247, %v1320
      %v1392 = vsel %vm1391, %v1247, %v1320
      %vm1393 = vcmp.gt.s32.totalorder %v1249, %v1323
      %v1394 = vsel %vm1393, %v1249, %v1323
      %vm1395 = vcmp.gt.s32.totalorder %v1251, %v1325
      %v1396 = vsel %vm1395, %v1251, %v1325
      %vm1397 = vcmp.gt.s32.totalorder %v1253, %v1328
      %v1398 = vsel %vm1397, %v1253, %v1328
      %vm1399 = vcmp.gt.s32.totalorder %v1255, %v1330
      %v1400 = vsel %vm1399, %v1255, %v1330
      %vm1401 = vcmp.gt.s32.totalorder %v1257, %v1333
      %v1402 = vsel %vm1401, %v1257, %v1333
      %vm1403 = vcmp.gt.s32.totalorder %v1259, %v1335
      %v1404 = vsel %vm1403, %v1259, %v1335
      %vm1405 = vcmp.gt.s32.totalorder %v1261, %v1338
      %v1406 = vsel %vm1405, %v1261, %v1338
      %vm1407 = vcmp.gt.s32.totalorder %v1263, %v1340
      %v1408 = vsel %vm1407, %v1263, %v1340
      %vm1409 = vcmp.gt.s32.totalorder %v1265, %v1343
      %v1410 = vsel %vm1409, %v1265, %v1343
      %vm1411 = vcmp.gt.s32.totalorder %v1267, %v1345
      %v1412 = vsel %vm1411, %v1267, %v1345
      %vm1413 = vcmp.gt.s32.totalorder %v1269, %v1348
      %v1414 = vsel %vm1413, %v1269, %v1348
      %vm1415 = vcmp.gt.s32.totalorder %v1271, %v1350
      %v1416 = vsel %vm1415, %v1271, %v1350
      %vm1417 = vcmp.gt.s32.totalorder %v1273, %v1353
      %v1418 = vsel %vm1417, %v1273, %v1353
      %vm1419 = vcmp.gt.s32.totalorder %v1275, %v1355
      %v1420 = vsel %vm1419, %v1275, %v1355
      %vm1421 = vcmp.gt.s32.totalorder %v1277, %v1358
      %v1422 = vsel %vm1421, %v1277, %v1358
      %vm1423 = vcmp.gt.s32.totalorder %v1279, %v1360
      %v1424 = vsel %vm1423, %v1279, %v1360
      %vm1425 = vcmp.eq.s32.totalorder %v1362, 0
      %vm1426 = vcmp.eq.s32.totalorder %v1364, 0
      %vm1427 = vcmp.eq.s32.totalorder %v1366, 0
      %vm1428 = vcmp.eq.s32.totalorder %v1368, 0
      %vm1429 = vcmp.eq.s32.totalorder %v1370, 0
      %vm1430 = vcmp.eq.s32.totalorder %v1372, 0
      %vm1431 = vcmp.eq.s32.totalorder %v1374, 0
      %vm1432 = vcmp.eq.s32.totalorder %v1376, 0
      %vm1433 = vcmp.eq.s32.totalorder %v1378, 0
      %vm1434 = vcmp.eq.s32.totalorder %v1380, 0
      %vm1435 = vcmp.eq.s32.totalorder %v1382, 0
      %vm1436 = vcmp.eq.s32.totalorder %v1384, 0
      %vm1437 = vcmp.eq.s32.totalorder %v1386, 0
      %vm1438 = vcmp.eq.s32.totalorder %v1388, 0
      %vm1439 = vcmp.eq.s32.totalorder %v1390, 0
      %vm1440 = vcmp.eq.s32.totalorder %v1392, 0
      %vm1441 = vcmp.eq.s32.totalorder %v1394, 0
      %vm1442 = vcmp.eq.s32.totalorder %v1396, 0
      %vm1443 = vcmp.eq.s32.totalorder %v1398, 0
      %vm1444 = vcmp.eq.s32.totalorder %v1400, 0
      %vm1445 = vcmp.eq.s32.totalorder %v1402, 0
      %vm1446 = vcmp.eq.s32.totalorder %v1404, 0
      %vm1447 = vcmp.eq.s32.totalorder %v1406, 0
      %vm1448 = vcmp.eq.s32.totalorder %v1408, 0
      %vm1449 = vcmp.eq.s32.totalorder %v1410, 0
      %vm1450 = vcmp.eq.s32.totalorder %v1412, 0
      %vm1451 = vcmp.eq.s32.totalorder %v1414, 0
      %vm1452 = vcmp.eq.s32.totalorder %v1416, 0
      %vm1453 = vcmp.eq.s32.totalorder %v1418, 0
      %vm1454 = vcmp.eq.s32.totalorder %v1420, 0
      %vm1455 = vcmp.eq.s32.totalorder %v1422, 0
      %vm1456 = vcmp.eq.s32.totalorder %v1424, 0
      %v1457 = vld [vmem:[%s179] sm:$0xff]
      %v1458 = vld [vmem:[%s179 + $0x8] sm:$0xff]
      %v1459 = vld [vmem:[%s179 + $0x10] sm:$0xff]
      %v1460 = vld [vmem:[%s179 + $0x18] sm:$0xff]
      %v1461 = vld [vmem:[%s179 + $0x20] sm:$0xff]
      %v1462 = vld [vmem:[%s179 + $0x28] sm:$0xff]
      %v1463 = vld [vmem:[%s179 + $0x30] sm:$0xff]
      %v1464 = vld [vmem:[%s179 + $0x38] sm:$0xff]
      %v1465 = vld [vmem:[%s179 + $0x40] sm:$0xff]
      %v1466 = vld [vmem:[%s179 + $0x48] sm:$0xff]
      %v1467 = vld [vmem:[%s179 + $0x50] sm:$0xff]
      %v1468 = vld [vmem:[%s179 + $0x58] sm:$0xff]
      %v1469 = vld [vmem:[%s179 + $0x60] sm:$0xff]
      %v1470 = vld [vmem:[%s179 + $0x68] sm:$0xff]
      %v1471 = vld [vmem:[%s179 + $0x70] sm:$0xff]
      %v1472 = vld [vmem:[%s179 + $0x78] sm:$0xff]
      %v1473 = vld [vmem:[%s179 + $0x80] sm:$0xff]
      %v1474 = vld [vmem:[%s179 + $0x88] sm:$0xff]
      %v1475 = vld [vmem:[%s179 + $0x90] sm:$0xff]
      %v1476 = vld [vmem:[%s179 + $0x98] sm:$0xff]
      %v1477 = vld [vmem:[%s179 + $0xa0] sm:$0xff]
      %v1478 = vld [vmem:[%s179 + $0xa8] sm:$0xff]
      %v1479 = vld [vmem:[%s179 + $0xb0] sm:$0xff]
      %v1480 = vld [vmem:[%s179 + $0xb8] sm:$0xff]
      %v1481 = vld [vmem:[%s179 + $0xc0] sm:$0xff]
      %v1482 = vld [vmem:[%s179 + $0xc8] sm:$0xff]
      %v1483 = vld [vmem:[%s179 + $0xd0] sm:$0xff]
      %v1484 = vld [vmem:[%s179 + $0xd8] sm:$0xff]
      %v1485 = vld [vmem:[%s179 + $0xe0] sm:$0xff]
      %v1486 = vld [vmem:[%s179 + $0xe8] sm:$0xff]
      %v1487 = vld [vmem:[%s179 + $0xf0] sm:$0xff]
      %v1488 = vld [vmem:[%s179 + $0xf8] sm:$0xff]
      %v1489 = vsel %vm1425, %v1457, 0.0
      %v1490 = vsel %vm1426, %v1458, 0.0
      %v1491 = vsel %vm1427, %v1459, 0.0
      %v1492 = vsel %vm1428, %v1460, 0.0
      %v1493 = vsel %vm1429, %v1461, 0.0
      %v1494 = vsel %vm1430, %v1462, 0.0
      %v1495 = vsel %vm1431, %v1463, 0.0
      %v1496 = vsel %vm1432, %v1464, 0.0
      %v1497 = vsel %vm1433, %v1465, 0.0
      %v1498 = vsel %vm1434, %v1466, 0.0
      %v1499 = vsel %vm1435, %v1467, 0.0
      %v1500 = vsel %vm1436, %v1468, 0.0
      %v1501 = vsel %vm1437, %v1469, 0.0
      %v1502 = vsel %vm1438, %v1470, 0.0
      %v1503 = vsel %vm1439, %v1471, 0.0
      %v1504 = vsel %vm1440, %v1472, 0.0
      %v1505 = vsel %vm1441, %v1473, 0.0
      %v1506 = vsel %vm1442, %v1474, 0.0
      %v1507 = vsel %vm1443, %v1475, 0.0
      %v1508 = vsel %vm1444, %v1476, 0.0
      %v1509 = vsel %vm1445, %v1477, 0.0
      %v1510 = vsel %vm1446, %v1478, 0.0
      %v1511 = vsel %vm1447, %v1479, 0.0
      %v1512 = vsel %vm1448, %v1480, 0.0
      %v1513 = vsel %vm1449, %v1481, 0.0
      %v1514 = vsel %vm1450, %v1482, 0.0
      %v1515 = vsel %vm1451, %v1483, 0.0
      %v1516 = vsel %vm1452, %v1484, 0.0
      %v1517 = vsel %vm1453, %v1485, 0.0
      %v1518 = vsel %vm1454, %v1486, 0.0
      %v1519 = vsel %vm1455, %v1487, 0.0
      %v1520 = vsel %vm1456, %v1488, 0.0
      %1521 = vst.msk [vmem:[%s187] sm:$0xff] %vm719, %v1489
      %1522 = vst.msk [vmem:[%s187 + $0x8] sm:$0xff] %vm719, %v1490
      %1523 = vst.msk [vmem:[%s187 + $0x10] sm:$0xff] %vm719, %v1491
      %1524 = vst.msk [vmem:[%s187 + $0x18] sm:$0xff] %vm719, %v1492
      %1525 = vst.msk [vmem:[%s187 + $0x20] sm:$0xff] %vm719, %v1493
      %1526 = vst.msk [vmem:[%s187 + $0x28] sm:$0xff] %vm719, %v1494
      %1527 = vst.msk [vmem:[%s187 + $0x30] sm:$0xff] %vm719, %v1495
      %1528 = vst.msk [vmem:[%s187 + $0x38] sm:$0xff] %vm719, %v1496
      %1529 = vst.msk [vmem:[%s187 + $0x40] sm:$0xff] %vm719, %v1497
      %1530 = vst.msk [vmem:[%s187 + $0x48] sm:$0xff] %vm719, %v1498
      %1531 = vst.msk [vmem:[%s187 + $0x50] sm:$0xff] %vm719, %v1499
      %1532 = vst.msk [vmem:[%s187 + $0x58] sm:$0xff] %vm719, %v1500
      %1533 = vst.msk [vmem:[%s187 + $0x60] sm:$0xff] %vm719, %v1501
      %1534 = vst.msk [vmem:[%s187 + $0x68] sm:$0xff] %vm719, %v1502
      %1535 = vst.msk [vmem:[%s187 + $0x70] sm:$0xff] %vm719, %v1503
      %1536 = vst.msk [vmem:[%s187 + $0x78] sm:$0xff] %vm719, %v1504
      %1537 = vst.msk [vmem:[%s187 + $0x80] sm:$0xff] %vm719, %v1505
      %1538 = vst.msk [vmem:[%s187 + $0x88] sm:$0xff] %vm719, %v1506
      %1539 = vst.msk [vmem:[%s187 + $0x90] sm:$0xff] %vm719, %v1507
      %1540 = vst.msk [vmem:[%s187 + $0x98] sm:$0xff] %vm719, %v1508
      %1541 = vst.msk [vmem:[%s187 + $0xa0] sm:$0xff] %vm719, %v1509
      %1542 = vst.msk [vmem:[%s187 + $0xa8] sm:$0xff] %vm719, %v1510
      %1543 = vst.msk [vmem:[%s187 + $0xb0] sm:$0xff] %vm719, %v1511
      %1544 = vst.msk [vmem:[%s187 + $0xb8] sm:$0xff] %vm719, %v1512
      %1545 = vst.msk [vmem:[%s187 + $0xc0] sm:$0xff] %vm719, %v1513
      %1546 = vst.msk [vmem:[%s187 + $0xc8] sm:$0xff] %vm719, %v1514
      %1547 = vst.msk [vmem:[%s187 + $0xd0] sm:$0xff] %vm719, %v1515
      %1548 = vst.msk [vmem:[%s187 + $0xd8] sm:$0xff] %vm719, %v1516
      %1549 = vst.msk [vmem:[%s187 + $0xe0] sm:$0xff] %vm719, %v1517
      %1550 = vst.msk [vmem:[%s187 + $0xe8] sm:$0xff] %vm719, %v1518
      %1551 = vst.msk [vmem:[%s187 + $0xf0] sm:$0xff] %vm719, %v1519
      %1552 = vst.msk [vmem:[%s187 + $0xf8] sm:$0xff] %vm719, %v1520
      %v1553 = vsel %vm1425, 1.0, 0.0
      %v1554 = vsel %vm1426, 1.0, 0.0
      %v1555 = vsel %vm1427, 1.0, 0.0
      %v1556 = vsel %vm1428, 1.0, 0.0
      %v1557 = vsel %vm1429, 1.0, 0.0
      %v1558 = vsel %vm1430, 1.0, 0.0
      %v1559 = vsel %vm1431, 1.0, 0.0
      %v1560 = vsel %vm1432, 1.0, 0.0
      %v1561 = vsel %vm1433, 1.0, 0.0
      %v1562 = vsel %vm1434, 1.0, 0.0
      %v1563 = vsel %vm1435, 1.0, 0.0
      %v1564 = vsel %vm1436, 1.0, 0.0
      %v1565 = vsel %vm1437, 1.0, 0.0
      %v1566 = vsel %vm1438, 1.0, 0.0
      %v1567 = vsel %vm1439, 1.0, 0.0
      %v1568 = vsel %vm1440, 1.0, 0.0
      %v1569 = vsel %vm1441, 1.0, 0.0
      %v1570 = vsel %vm1442, 1.0, 0.0
      %v1571 = vsel %vm1443, 1.0, 0.0
      %v1572 = vsel %vm1444, 1.0, 0.0
      %v1573 = vsel %vm1445, 1.0, 0.0
      %v1574 = vsel %vm1446, 1.0, 0.0
      %v1575 = vsel %vm1447, 1.0, 0.0
      %v1576 = vsel %vm1448, 1.0, 0.0
      %v1577 = vsel %vm1449, 1.0, 0.0
      %v1578 = vsel %vm1450, 1.0, 0.0
      %v1579 = vsel %vm1451, 1.0, 0.0
      %v1580 = vsel %vm1452, 1.0, 0.0
      %v1581 = vsel %vm1453, 1.0, 0.0
      %v1582 = vsel %vm1454, 1.0, 0.0
      %v1583 = vsel %vm1455, 1.0, 0.0
      %v1584 = vsel %vm1456, 1.0, 0.0
      %v1585 = vsel %vm719, %v1553, 0.0
      %v1586 = vsel %vm719, %v1554, 0.0
      %v1587 = vadd.f32 %v1585, %v1586
      %v1588 = vsel %vm719, %v1555, 0.0
      %v1589 = vadd.f32 %v1587, %v1588
      %v1590 = vsel %vm719, %v1556, 0.0
      %v1591 = vadd.f32 %v1589, %v1590
      %v1592 = vsel %vm719, %v1557, 0.0
      %v1593 = vadd.f32 %v1591, %v1592
      %v1594 = vsel %vm719, %v1558, 0.0
      %v1595 = vadd.f32 %v1593, %v1594
      %v1596 = vsel %vm719, %v1559, 0.0
      %v1597 = vadd.f32 %v1595, %v1596
      %v1598 = vsel %vm719, %v1560, 0.0
      %v1599 = vadd.f32 %v1597, %v1598
      %v1600 = vsel %vm719, %v1561, 0.0
      %v1601 = vadd.f32 %v1599, %v1600
      %v1602 = vsel %vm719, %v1562, 0.0
      %v1603 = vadd.f32 %v1601, %v1602
      %v1604 = vsel %vm719, %v1563, 0.0
      %v1605 = vadd.f32 %v1603, %v1604
      %v1606 = vsel %vm719, %v1564, 0.0
      %v1607 = vadd.f32 %v1605, %v1606
      %v1608 = vsel %vm719, %v1565, 0.0
      %v1609 = vadd.f32 %v1607, %v1608
      %v1610 = vsel %vm719, %v1566, 0.0
      %v1611 = vadd.f32 %v1609, %v1610
      %v1612 = vsel %vm719, %v1567, 0.0
      %v1613 = vadd.f32 %v1611, %v1612
      %v1614 = vsel %vm719, %v1568, 0.0
      %v1615 = vadd.f32 %v1613, %v1614
      %v1616 = vsel %vm719, %v1569, 0.0
      %v1617 = vadd.f32 %v1615, %v1616
      %v1618 = vsel %vm719, %v1570, 0.0
      %v1619 = vadd.f32 %v1617, %v1618
      %v1620 = vsel %vm719, %v1571, 0.0
      %v1621 = vadd.f32 %v1619, %v1620
      %v1622 = vsel %vm719, %v1572, 0.0
      %v1623 = vadd.f32 %v1621, %v1622
      %v1624 = vsel %vm719, %v1573, 0.0
      %v1625 = vadd.f32 %v1623, %v1624
      %v1626 = vsel %vm719, %v1574, 0.0
      %v1627 = vadd.f32 %v1625, %v1626
      %v1628 = vsel %vm719, %v1575, 0.0
      %v1629 = vadd.f32 %v1627, %v1628
      %v1630 = vsel %vm719, %v1576, 0.0
      %v1631 = vadd.f32 %v1629, %v1630
      %v1632 = vsel %vm719, %v1577, 0.0
      %v1633 = vadd.f32 %v1631, %v1632
      %v1634 = vsel %vm719, %v1578, 0.0
      %v1635 = vadd.f32 %v1633, %v1634
      %v1636 = vsel %vm719, %v1579, 0.0
      %v1637 = vadd.f32 %v1635, %v1636
      %v1638 = vsel %vm719, %v1580, 0.0
      %v1639 = vadd.f32 %v1637, %v1638
      %v1640 = vsel %vm719, %v1581, 0.0
      %v1641 = vadd.f32 %v1639, %v1640
      %v1642 = vsel %vm719, %v1582, 0.0
      %v1643 = vadd.f32 %v1641, %v1642
      %v1644 = vsel %vm719, %v1583, 0.0
      %v1645 = vadd.f32 %v1643, %v1644
      %v1646 = vsel %vm719, %v1584, 0.0
      %v1647 = vadd.f32 %v1645, %v1646
      %1648 = vadd.xlane.f32.xlu0 %v1647
      %v1649 = vpop.xlane.xlu0 %1648
      %v1650 = vrot.slane %v1649, 4
      %v1651 = vadd.f32 %v1649, %v1650
      %v1652 = vrot.slane %v1651, 2
      %v1653 = vadd.f32 %v1651, %v1652
      %v1654 = vrot.slane %v1653, 1
      %v1655 = vadd.f32 %v1653, %v1654
      %s1656 = vtos %v1655
      %v1657 = vstv %s1656
      %vm1658 = vcmask 0
      %1659 = vst.msk [vmem:[%s193] sm:$0x1] %vm1658, %v1657
      %p1660 = scmp.lt.s32.totalorder %s20, 1
      %s1661 = scalar_select %p1660, %s20, 1
      %p1662 = scmp.lt.s32.totalorder %s21, 0
      %s1663 = scalar_select %p1662, %s21, 0
      %s1664 = smul.addr %s1661, 32
      %s1665 = sadd.s32 %s1663, %s1664
      %s1666 = smul.addr %s1665, 8
      %s1667 = scalar_lea.vmem %s2, %s1666
      %p1668 = scmp.lt.s32.totalorder %s20, 1
      %s1669 = scalar_select %p1668, %s20, 1
      %p1670 = scmp.lt.s32.totalorder %s21, 0
      %s1671 = scalar_select %p1670, %s21, 0
      %s1672 = sadd.s32 %s1671, %s1669
      %s1673 = scalar_lea.vmem %s3, %s1672
      // Predicated region
      $region25: #{tpu_custom_call.1} parent=23 // pred_check
        %p1674 = pneg %p76
      $region26: #{tpu_custom_call.1} parent=23 // pred_check_branch
        %1676 = sbr.rel (%p1674) target = $region28
      $region27: #{tpu_custom_call.1} parent=23 // pred_region
        _
      $region28: #{tpu_custom_call.1} parent=23 // pred_fallthru
        _
      // Predicated region
      $region29: #{tpu_custom_call.1} parent=23 // pred_check
        %p1677 = pneg %p104
      $region30: #{tpu_custom_call.1} parent=23 // pred_check_branch
        %1679 = sbr.rel (%p1677) target = $region32
      $region31: #{tpu_custom_call.1} parent=23 // pred_region
        _
      $region32: #{tpu_custom_call.1} parent=23 // pred_fallthru
        _
    $region24: #{tpu_custom_call.1} parent=5 // pred_fallthru
      _
    %p1680 = scmp.le.s32.totalorder 2, %s11
    // Predicated region
    $region33: #{tpu_custom_call.1} parent=5 // pred_check
      %p1681 = pneg %p1680
    $region34: #{tpu_custom_call.1} parent=5 // pred_check_branch
      %1683 = sbr.rel (%p1681) target = $region36
    $region35: #{tpu_custom_call.1} parent=5 // pred_region
      %s1684 = ssub.s32 %s11, 2
      // Predicated region
      $region37: #{tpu_custom_call.1} parent=35 // pred_check
        %p1685 = pneg %p82
      $region38: #{tpu_custom_call.1} parent=35 // pred_check_branch
        %1687 = sbr.rel (%p1685) target = $region40
      $region39: #{tpu_custom_call.1} parent=35 // pred_region
        %p1688 = scmp.lt.s32.totalorder %s22, 1
        %s1689 = scalar_select %p1688, %s22, 1
        %p1690 = scmp.lt.s32.totalorder %s23, 0
        %s1691 = scalar_select %p1690, %s23, 0
        %s1692 = smul.addr %s1689, 32
        %s1693 = sadd.s32 %s1691, %s1692
        %s1694 = smul.addr %s1693, 8
        %s1695 = scalar_lea.vmem %s2, %s1694
      $region40: #{tpu_custom_call.1} parent=35 // pred_fallthru
        _
      // Predicated region
      $region41: #{tpu_custom_call.1} parent=35 // pred_check
        %p1696 = pneg %p110
      $region42: #{tpu_custom_call.1} parent=35 // pred_check_branch
        %1698 = sbr.rel (%p1696) target = $region44
      $region43: #{tpu_custom_call.1} parent=35 // pred_region
        %p1699 = scmp.lt.s32.totalorder %s22, 1
        %s1700 = scalar_select %p1699, %s22, 1
        %p1701 = scmp.lt.s32.totalorder %s23, 0
        %s1702 = scalar_select %p1701, %s23, 0
        %s1703 = sadd.s32 %s1702, %s1700
        %s1704 = scalar_lea.vmem %s3, %s1703
      $region44: #{tpu_custom_call.1} parent=35 // pred_fallthru
        _
    $region36: #{tpu_custom_call.1} parent=5 // pred_fallthru
      _
  $region6: #{tpu_custom_call.1} parent=0 // loop_footer
    %s15 = sadd.s32 1, %s11
  $region7: #{tpu_custom_call.1} parent=0 // loop_footer_branch
    %10 = sbr.rel target = $region3
  $region8: #{tpu_custom_call.1} parent=0 // loop_exit
    _

</llo_original>
